<compile_context>
chip_gen: v6e
topology: v6e:2x2x1
jax: 0.10.0
libtpu: 0.0.40
codegen_flags: <defaults>
</compile_context>

<pallas_src>
import jax
import jax.numpy as jnp
from jax import lax
from jax.experimental import pallas as pl
from jax.experimental.pallas import tpu as pltpu

# --- small, deterministic config (mirrors config.lstm_hidden_dim / embedding_weight shape) ---
VOCAB = 100
EMBED_DIM = 32     # embedding_weight.shape[1]
HIDDEN = 32        # config.lstm_hidden_dim
B = 2              # batch
T = 8              # sequence length
BP = 8             # batch padded to a full (8-sublane) group
VPAD = 128         # vocab padded to a full lane group

_VMEM = pl.BlockSpec(memory_space=pltpu.MemorySpace.VMEM)


# ------------------------- fused Pallas kernel -------------------------

def bilstm_fused_kernel(ids_f_ref, ids_b_ref, table_ref, whh_ref,
                        out_ref, pool_ref, xp_scr):
    """Fused embedding gather + bidirectional LSTM + mean pool.

    ids_f_ref : [T*BP, 1]      int32   fwd token id for row r = t*BP + b  (pad rows -> zero table row)
    ids_b_ref : [T*BP, 1]      int32   bwd token id (time-reversed) for row r = t*BP + b
    table_ref : [2*VPAD, 8H]   float32 fused input-projection table (biases folded, gate-reordered)
    whh_ref   : [2H, 8H]       float32 block-diagonal recurrent weights (gate-reordered)
    out_ref   : [BP, T*2H]     float32 all hidden states, lane-dense (wrapper reshapes)
    pool_ref  : [BP, 2H]       float32 mean over time
    xp_scr    : [T*BP, 8H]     float32 VMEM scratch: hoisted per-step input projections
    """
    TBp = ids_f_ref.shape[0]
    BPn, H2 = pool_ref.shape
    H = H2 // 2
    Tn = TBp // BPn
    K2 = table_ref.shape[0]
    vpad = K2 // 2

    # ---- 1) "two-hot" select + fused input projection + biases: ONE MXU matmul ----
    col = lax.broadcasted_iota(jnp.int32, (TBp, K2), 1)
    sel = jnp.logical_or(col == ids_f_ref[...],
                         col == ids_b_ref[...] + vpad).astype(jnp.float32)
    xp_scr[...] = jnp.dot(sel, table_ref[...], preferred_element_type=jnp.float32)

    # ---- 2) recurrence: both directions in one block-diagonal matmul per step ----
    whh = whh_ref[...]                                     # [2H, 8H]
    zeros = jnp.zeros((BPn, H2), jnp.float32)
    h_cat = zeros                                          # [h_f | h_b]
    c_cat = zeros
    acc = zeros
    h_steps = []

    for t in range(Tn):
        x_t = xp_scr[t * BPn:(t + 1) * BPn, :]             # vreg-aligned plain load [BP, 8H]
        gates = x_t + jnp.dot(h_cat, whh, preferred_element_type=jnp.float32)
        # gate columns: [i_f|i_b | f_f|f_b | o_f|o_b | g_f|g_b]
        sig = jax.nn.sigmoid(gates[:, 0:6 * H])            # sigmoid only on i|f|o block
        g = jnp.tanh(gates[:, 6 * H:8 * H])                # tanh only on g block
        c_cat = sig[:, 2 * H:4 * H] * c_cat + sig[:, 0:2 * H] * g
        h_cat = sig[:, 4 * H:6 * H] * jnp.tanh(c_cat)
        acc = acc + h_cat
        h_steps.append(h_cat)

    # ---- 3) single lane-dense output store + mean pool ----
    pieces = []
    for s in range(Tn):
        pieces.append(h_steps[s][:, 0:H])                  # forward hidden at time s
        pieces.append(h_steps[Tn - 1 - s][:, H:2 * H])     # backward hidden at time s
    out_ref[...] = jnp.concatenate(pieces, axis=1)         # [BP, T*2H]
    pool_ref[...] = acc * jnp.float32(1.0 / Tn)


# ------------------------- wrapper -------------------------

def _split_ifgo(w):
    H = w.shape[0] // 4
    return w[0:H], w[H:2 * H], w[2 * H:3 * H], w[3 * H:4 * H]


def _interleave_fwd_bwd(p, fwd):
    """Place 4 H-wide gate blocks (order i,f,o,g) into the 8H layout
    [i_f|i_b|f_f|f_b|o_f|o_b|g_f|g_b], zero-filling the other direction."""
    H = HIDDEN
    Z = jnp.zeros_like(p[:, 0:H])
    out = []
    for k in range(4):
        blk = p[:, k * H:(k + 1) * H]
        out.extend([blk, Z] if fwd else [Z, blk])
    return jnp.concatenate(out, axis=1)


def _prepare_weights(params):
    H = HIDDEN
    emb = params["embedding"].astype(jnp.float32)                      # [V, E]

    def dir_input_proj(w_ih, b_ih, b_hh):
        i, f, g, o = _split_ifgo(w_ih.astype(jnp.float32))
        w = jnp.concatenate([i, f, o, g], axis=0).T                    # [E, 4H] cols i,f,o,g
        bi, bf, bg, bo = _split_ifgo((b_ih + b_hh).astype(jnp.float32))
        b = jnp.concatenate([bi, bf, bo, bg], axis=0)                  # [4H]
        return emb @ w + b[None, :]                                    # [V, 4H]

    proj_f = dir_input_proj(params["w_ih_f"], params["b_ih_f"], params["b_hh_f"])
    proj_b = dir_input_proj(params["w_ih_b"], params["b_ih_b"], params["b_hh_b"])

    table = jnp.zeros((2 * VPAD, 8 * H), jnp.float32)
    table = table.at[0:VOCAB].set(_interleave_fwd_bwd(proj_f, True))
    table = table.at[VPAD:VPAD + VOCAB].set(_interleave_fwd_bwd(proj_b, False))

    def dir_whh(w_hh):
        i, f, g, o = _split_ifgo(w_hh.astype(jnp.float32))
        return jnp.concatenate([i, f, o, g], axis=0).T                 # [H, 4H] cols i,f,o,g

    whh_blk = jnp.concatenate(
        [_interleave_fwd_bwd(dir_whh(params["w_hh_f"]), True),
         _interleave_fwd_bwd(dir_whh(params["w_hh_b"]), False)], axis=0)   # [2H, 8H]
    return table, whh_blk


def bilstm_forward(token_ids, params):
    H = HIDDEN
    Bn, Tn = token_ids.shape

    table, whh_blk = _prepare_weights(params)

    # fwd ids: row r = t*BP + b holds ids[b, t]; bwd ids hold ids[b, T-1-t].
    # Padding rows point at zero table rows (VPAD-1 is zero in both halves) -> stay exactly 0.
    pad_id = VPAD - 1
    ids_f = jnp.full((Tn, BP), pad_id, jnp.int32).at[:, :Bn].set(token_ids.T)
    ids_b = jnp.full((Tn, BP), pad_id, jnp.int32).at[:, :Bn].set(token_ids[:, ::-1].T)
    ids_f = ids_f.reshape(Tn * BP, 1)
    ids_b = ids_b.reshape(Tn * BP, 1)

    out_flat, pool_pad = pl.pallas_call(
        bilstm_fused_kernel,
        out_shape=(jax.ShapeDtypeStruct((BP, Tn * 2 * H), jnp.float32),
                   jax.ShapeDtypeStruct((BP, 2 * H), jnp.float32)),
        in_specs=[_VMEM, _VMEM, _VMEM, _VMEM],
        out_specs=(_VMEM, _VMEM),
        scratch_shapes=[pltpu.VMEM((Tn * BP, 8 * H), jnp.float32)],
    )(ids_f, ids_b, table, whh_blk)

    lstm_out = out_flat[:Bn].reshape(Bn, Tn, 2 * H)
    lstm_out_pool = pool_pad[:Bn]
    return lstm_out, lstm_out_pool


# ------------------------- pure-JAX reference (for correctness check) -------------------------

def _ref_lstm_dir(emb, w_ih, w_hh, b_ih, b_hh):
    Bn, Tn, _ = emb.shape
    H = w_hh.shape[1]

    def step(carry, x_t):
        h, c = carry
        gates = x_t @ w_ih.T + h @ w_hh.T + b_ih + b_hh
        i = jax.nn.sigmoid(gates[:, :H])
        f = jax.nn.sigmoid(gates[:, H:2 * H])
        g = jnp.tanh(gates[:, 2 * H:3 * H])
        o = jax.nn.sigmoid(gates[:, 3 * H:])
        c_new = f * c + i * g
        h_new = o * jnp.tanh(c_new)
        return (h_new, c_new), h_new

    init = (jnp.zeros((Bn, H), jnp.float32), jnp.zeros((Bn, H), jnp.float32))
    _, ys = lax.scan(step, init, jnp.transpose(emb, (1, 0, 2)))
    return jnp.transpose(ys, (1, 0, 2))


def _ref_forward(token_ids, params):
    emb = params["embedding"][token_ids].astype(jnp.float32)
    out_f = _ref_lstm_dir(emb, params["w_ih_f"], params["w_hh_f"],
                          params["b_ih_f"], params["b_hh_f"])
    out_b = _ref_lstm_dir(emb[:, ::-1, :], params["w_ih_b"], params["w_hh_b"],
                          params["b_ih_b"], params["b_hh_b"])[:, ::-1, :]
    lstm_out = jnp.concatenate([out_f, out_b], axis=-1)
    return lstm_out, jnp.mean(lstm_out, axis=1)


# ------------------------- main -------------------------

if __name__ == "__main__":
    key = jax.random.PRNGKey(0)
    ks = jax.random.split(key, 10)
    scale = 1.0 / jnp.sqrt(jnp.float32(HIDDEN))

    params = {
        "embedding": jax.random.normal(ks[0], (VOCAB, EMBED_DIM), jnp.float32) * 0.1,
        # PyTorch nn.LSTM parameter shapes (bidirectional=True, one layer, gate order i,f,g,o)
        "w_ih_f": jax.random.uniform(ks[1], (4 * HIDDEN, EMBED_DIM), jnp.float32, -scale, scale),
        "w_hh_f": jax.random.uniform(ks[2], (4 * HIDDEN, HIDDEN), jnp.float32, -scale, scale),
        "b_ih_f": jax.random.uniform(ks[3], (4 * HIDDEN,), jnp.float32, -scale, scale),
        "b_hh_f": jax.random.uniform(ks[4], (4 * HIDDEN,), jnp.float32, -scale, scale),
        "w_ih_b": jax.random.uniform(ks[5], (4 * HIDDEN, EMBED_DIM), jnp.float32, -scale, scale),
        "w_hh_b": jax.random.uniform(ks[6], (4 * HIDDEN, HIDDEN), jnp.float32, -scale, scale),
        "b_ih_b": jax.random.uniform(ks[7], (4 * HIDDEN,), jnp.float32, -scale, scale),
        "b_hh_b": jax.random.uniform(ks[8], (4 * HIDDEN,), jnp.float32, -scale, scale),
    }
    token_ids = jax.random.randint(ks[9], (B, T), 0, VOCAB, dtype=jnp.int32)

    lstm_out, lstm_out_pool = jax.jit(bilstm_forward)(token_ids, params)
    jax.block_until_ready((lstm_out, lstm_out_pool))

    assert lstm_out.shape == (B, T, 2 * HIDDEN)
    assert lstm_out_pool.shape == (B, 2 * HIDDEN)

    ref_out, ref_pool = _ref_forward(token_ids, params)
    assert jnp.allclose(lstm_out, ref_out, atol=2e-3, rtol=2e-3)
    assert jnp.allclose(lstm_out_pool, ref_pool, atol=2e-3, rtol=2e-3)

    print("KERNEL_OK")
</pallas_src>

<mosaic_0001>
module attributes {stable_mosaic.version = 11 : i64} {
  func.func @bilstm_fused_kernel(%arg0: memref<64x1xi32, #tpu.memory_space<vmem>>, %arg1: memref<64x1xi32, #tpu.memory_space<vmem>>, %arg2: memref<256x256xf32, #tpu.memory_space<vmem>>, %arg3: memref<64x256xf32, #tpu.memory_space<vmem>>, %arg4: memref<8x512xf32, #tpu.memory_space<vmem>>, %arg5: memref<8x64xf32, #tpu.memory_space<vmem>>, %arg6: memref<64x256xf32, #tpu.memory_space<vmem>>) attributes {dimension_semantics = [], scalar_prefetch = 0 : i64, scratch_operands = 1 : i64, tpu.core_type = #tpu.core_type<tc>} {
    %0 = tpu.iota {dimensions = array<i32: 1>} : vector<64x256xi32>
    %c0 = arith.constant 0 : index
    %c0_0 = arith.constant 0 : index
    %1 = vector.load %arg0[%c0, %c0_0] : memref<64x1xi32, #tpu.memory_space<vmem>>, vector<64x1xi32>
    %2 = vector.broadcast %1 : vector<64x1xi32> to vector<64x256xi32>
    %3 = arith.cmpi eq, %0, %2 : vector<64x256xi32>
    %c0_1 = arith.constant 0 : index
    %c0_2 = arith.constant 0 : index
    %4 = vector.load %arg1[%c0_1, %c0_2] : memref<64x1xi32, #tpu.memory_space<vmem>>, vector<64x1xi32>
    %c128_i32 = arith.constant 128 : i32
    %5 = vector.broadcast %c128_i32 : i32 to vector<64x1xi32>
    %6 = arith.addi %4, %5 : vector<64x1xi32>
    %7 = vector.broadcast %6 : vector<64x1xi32> to vector<64x256xi32>
    %8 = arith.cmpi eq, %0, %7 : vector<64x256xi32>
    %9 = arith.ori %3, %8 : vector<64x256xi1>
    %10 = arith.extui %9 : vector<64x256xi1> to vector<64x256xi32>
    %11 = arith.sitofp %10 : vector<64x256xi32> to vector<64x256xf32>
    %c0_3 = arith.constant 0 : index
    %c0_4 = arith.constant 0 : index
    %12 = vector.load %arg2[%c0_3, %c0_4] : memref<256x256xf32, #tpu.memory_space<vmem>>, vector<256x256xf32>
    %cst = arith.constant dense<0.000000e+00> : vector<64x256xf32>
    %13 = tpu.matmul %11, %12, %cst {dimension_numbers = #tpu.dot_dimension_numbers<[1], [0], [0], [1], [0, 0, 1, 1], [], []>} : vector<64x256xf32>, vector<256x256xf32>, vector<64x256xf32> -> vector<64x256xf32>
    %c0_5 = arith.constant 0 : index
    %c0_6 = arith.constant 0 : index
    %14 = vector.load %arg6[%c0_5, %c0_6] : memref<64x256xf32, #tpu.memory_space<vmem>>, vector<64x256xf32>
    tpu.vector_store %arg6[%c0_5, %c0_6], %13 {strides = array<i32>} : memref<64x256xf32, #tpu.memory_space<vmem>>, vector<64x256xf32>,
    %c0_7 = arith.constant 0 : index
    %c0_8 = arith.constant 0 : index
    %15 = vector.load %arg3[%c0_7, %c0_8] : memref<64x256xf32, #tpu.memory_space<vmem>>, vector<64x256xf32>
    %cst_9 = arith.constant 0.000000e+00 : f32
    %16 = vector.broadcast %cst_9 : f32 to vector<8x64xf32>
    %c0_10 = arith.constant 0 : index
    %c0_11 = arith.constant 0 : index
    %17 = vector.load %arg6[%c0_10, %c0_11] : memref<64x256xf32, #tpu.memory_space<vmem>>, vector<8x256xf32>
    %cst_12 = arith.constant dense<0.000000e+00> : vector<8x256xf32>
    %18 = tpu.matmul %16, %15, %cst_12 {dimension_numbers = #tpu.dot_dimension_numbers<[1], [0], [0], [1], [0, 0, 1, 1], [], []>} : vector<8x64xf32>, vector<64x256xf32>, vector<8x256xf32> -> vector<8x256xf32>
    %19 = arith.addf %17, %18 : vector<8x256xf32>
    %20 = vector.extract_strided_slice %19 {offsets = [0, 0], sizes = [8, 192], strides = [1, 1]} : vector<8x256xf32> to vector<8x192xf32>
    %21 = arith.negf %20 : vector<8x192xf32>
    %22 = math.exp %21 : vector<8x192xf32>
    %cst_13 = arith.constant 1.000000e+00 : f32
    %23 = vector.broadcast %cst_13 : f32 to vector<8x192xf32>
    %24 = arith.addf %23, %22 : vector<8x192xf32>
    %25 = arith.divf %23, %24 : vector<8x192xf32>
    %26 = vector.extract_strided_slice %19 {offsets = [0, 192], sizes = [8, 64], strides = [1, 1]} : vector<8x256xf32> to vector<8x64xf32>
    %27 = math.tanh %26 : vector<8x64xf32>
    %28 = vector.extract_strided_slice %25 {offsets = [0, 64], sizes = [8, 64], strides = [1, 1]} : vector<8x192xf32> to vector<8x64xf32>
    %29 = arith.mulf %28, %16 : vector<8x64xf32>
    %30 = vector.extract_strided_slice %25 {offsets = [0, 0], sizes = [8, 64], strides = [1, 1]} : vector<8x192xf32> to vector<8x64xf32>
    %31 = arith.mulf %30, %27 : vector<8x64xf32>
    %32 = arith.addf %29, %31 : vector<8x64xf32>
    %33 = vector.extract_strided_slice %25 {offsets = [0, 128], sizes = [8, 64], strides = [1, 1]} : vector<8x192xf32> to vector<8x64xf32>
    %34 = math.tanh %32 : vector<8x64xf32>
    %35 = arith.mulf %33, %34 : vector<8x64xf32>
    %36 = arith.addf %16, %35 : vector<8x64xf32>
    %c8 = arith.constant 8 : index
    %c0_14 = arith.constant 0 : index
    %37 = vector.load %arg6[%c8, %c0_14] : memref<64x256xf32, #tpu.memory_space<vmem>>, vector<8x256xf32>
    %cst_15 = arith.constant dense<0.000000e+00> : vector<8x256xf32>
    %38 = tpu.matmul %35, %15, %cst_15 {dimension_numbers = #tpu.dot_dimension_numbers<[1], [0], [0], [1], [0, 0, 1, 1], [], []>} : vector<8x64xf32>, vector<64x256xf32>, vector<8x256xf32> -> vector<8x256xf32>
    %39 = arith.addf %37, %38 : vector<8x256xf32>
    %40 = vector.extract_strided_slice %39 {offsets = [0, 0], sizes = [8, 192], strides = [1, 1]} : vector<8x256xf32> to vector<8x192xf32>
    %41 = arith.negf %40 : vector<8x192xf32>
    %42 = math.exp %41 : vector<8x192xf32>
    %cst_16 = arith.constant 1.000000e+00 : f32
    %43 = vector.broadcast %cst_16 : f32 to vector<8x192xf32>
    %44 = arith.addf %43, %42 : vector<8x192xf32>
    %45 = arith.divf %43, %44 : vector<8x192xf32>
    %46 = vector.extract_strided_slice %39 {offsets = [0, 192], sizes = [8, 64], strides = [1, 1]} : vector<8x256xf32> to vector<8x64xf32>
    %47 = math.tanh %46 : vector<8x64xf32>
    %48 = vector.extract_strided_slice %45 {offsets = [0, 64], sizes = [8, 64], strides = [1, 1]} : vector<8x192xf32> to vector<8x64xf32>
    %49 = arith.mulf %48, %32 : vector<8x64xf32>
    %50 = vector.extract_strided_slice %45 {offsets = [0, 0], sizes = [8, 64], strides = [1, 1]} : vector<8x192xf32> to vector<8x64xf32>
    %51 = arith.mulf %50, %47 : vector<8x64xf32>
    %52 = arith.addf %49, %51 : vector<8x64xf32>
    %53 = vector.extract_strided_slice %45 {offsets = [0, 128], sizes = [8, 64], strides = [1, 1]} : vector<8x192xf32> to vector<8x64xf32>
    %54 = math.tanh %52 : vector<8x64xf32>
    %55 = arith.mulf %53, %54 : vector<8x64xf32>
    %56 = arith.addf %36, %55 : vector<8x64xf32>
    %c16 = arith.constant 16 : index
    %c0_17 = arith.constant 0 : index
    %57 = vector.load %arg6[%c16, %c0_17] : memref<64x256xf32, #tpu.memory_space<vmem>>, vector<8x256xf32>
    %cst_18 = arith.constant dense<0.000000e+00> : vector<8x256xf32>
    %58 = tpu.matmul %55, %15, %cst_18 {dimension_numbers = #tpu.dot_dimension_numbers<[1], [0], [0], [1], [0, 0, 1, 1], [], []>} : vector<8x64xf32>, vector<64x256xf32>, vector<8x256xf32> -> vector<8x256xf32>
    %59 = arith.addf %57, %58 : vector<8x256xf32>
    %60 = vector.extract_strided_slice %59 {offsets = [0, 0], sizes = [8, 192], strides = [1, 1]} : vector<8x256xf32> to vector<8x192xf32>
    %61 = arith.negf %60 : vector<8x192xf32>
    %62 = math.exp %61 : vector<8x192xf32>
    %cst_19 = arith.constant 1.000000e+00 : f32
    %63 = vector.broadcast %cst_19 : f32 to vector<8x192xf32>
    %64 = arith.addf %63, %62 : vector<8x192xf32>
    %65 = arith.divf %63, %64 : vector<8x192xf32>
    %66 = vector.extract_strided_slice %59 {offsets = [0, 192], sizes = [8, 64], strides = [1, 1]} : vector<8x256xf32> to vector<8x64xf32>
    %67 = math.tanh %66 : vector<8x64xf32>
    %68 = vector.extract_strided_slice %65 {offsets = [0, 64], sizes = [8, 64], strides = [1, 1]} : vector<8x192xf32> to vector<8x64xf32>
    %69 = arith.mulf %68, %52 : vector<8x64xf32>
    %70 = vector.extract_strided_slice %65 {offsets = [0, 0], sizes = [8, 64], strides = [1, 1]} : vector<8x192xf32> to vector<8x64xf32>
    %71 = arith.mulf %70, %67 : vector<8x64xf32>
    %72 = arith.addf %69, %71 : vector<8x64xf32>
    %73 = vector.extract_strided_slice %65 {offsets = [0, 128], sizes = [8, 64], strides = [1, 1]} : vector<8x192xf32> to vector<8x64xf32>
    %74 = math.tanh %72 : vector<8x64xf32>
    %75 = arith.mulf %73, %74 : vector<8x64xf32>
    %76 = arith.addf %56, %75 : vector<8x64xf32>
    %c24 = arith.constant 24 : index
    %c0_20 = arith.constant 0 : index
    %77 = vector.load %arg6[%c24, %c0_20] : memref<64x256xf32, #tpu.memory_space<vmem>>, vector<8x256xf32>
    %cst_21 = arith.constant dense<0.000000e+00> : vector<8x256xf32>
    %78 = tpu.matmul %75, %15, %cst_21 {dimension_numbers = #tpu.dot_dimension_numbers<[1], [0], [0], [1], [0, 0, 1, 1], [], []>} : vector<8x64xf32>, vector<64x256xf32>, vector<8x256xf32> -> vector<8x256xf32>
    %79 = arith.addf %77, %78 : vector<8x256xf32>
    %80 = vector.extract_strided_slice %79 {offsets = [0, 0], sizes = [8, 192], strides = [1, 1]} : vector<8x256xf32> to vector<8x192xf32>
    %81 = arith.negf %80 : vector<8x192xf32>
    %82 = math.exp %81 : vector<8x192xf32>
    %cst_22 = arith.constant 1.000000e+00 : f32
    %83 = vector.broadcast %cst_22 : f32 to vector<8x192xf32>
    %84 = arith.addf %83, %82 : vector<8x192xf32>
    %85 = arith.divf %83, %84 : vector<8x192xf32>
    %86 = vector.extract_strided_slice %79 {offsets = [0, 192], sizes = [8, 64], strides = [1, 1]} : vector<8x256xf32> to vector<8x64xf32>
    %87 = math.tanh %86 : vector<8x64xf32>
    %88 = vector.extract_strided_slice %85 {offsets = [0, 64], sizes = [8, 64], strides = [1, 1]} : vector<8x192xf32> to vector<8x64xf32>
    %89 = arith.mulf %88, %72 : vector<8x64xf32>
    %90 = vector.extract_strided_slice %85 {offsets = [0, 0], sizes = [8, 64], strides = [1, 1]} : vector<8x192xf32> to vector<8x64xf32>
    %91 = arith.mulf %90, %87 : vector<8x64xf32>
    %92 = arith.addf %89, %91 : vector<8x64xf32>
    %93 = vector.extract_strided_slice %85 {offsets = [0, 128], sizes = [8, 64], strides = [1, 1]} : vector<8x192xf32> to vector<8x64xf32>
    %94 = math.tanh %92 : vector<8x64xf32>
    %95 = arith.mulf %93, %94 : vector<8x64xf32>
    %96 = arith.addf %76, %95 : vector<8x64xf32>
    %c32 = arith.constant 32 : index
    %c0_23 = arith.constant 0 : index
    %97 = vector.load %arg6[%c32, %c0_23] : memref<64x256xf32, #tpu.memory_space<vmem>>, vector<8x256xf32>
    %cst_24 = arith.constant dense<0.000000e+00> : vector<8x256xf32>
    %98 = tpu.matmul %95, %15, %cst_24 {dimension_numbers = #tpu.dot_dimension_numbers<[1], [0], [0], [1], [0, 0, 1, 1], [], []>} : vector<8x64xf32>, vector<64x256xf32>, vector<8x256xf32> -> vector<8x256xf32>
    %99 = arith.addf %97, %98 : vector<8x256xf32>
    %100 = vector.extract_strided_slice %99 {offsets = [0, 0], sizes = [8, 192], strides = [1, 1]} : vector<8x256xf32> to vector<8x192xf32>
    %101 = arith.negf %100 : vector<8x192xf32>
    %102 = math.exp %101 : vector<8x192xf32>
    %cst_25 = arith.constant 1.000000e+00 : f32
    %103 = vector.broadcast %cst_25 : f32 to vector<8x192xf32>
    %104 = arith.addf %103, %102 : vector<8x192xf32>
    %105 = arith.divf %103, %104 : vector<8x192xf32>
    %106 = vector.extract_strided_slice %99 {offsets = [0, 192], sizes = [8, 64], strides = [1, 1]} : vector<8x256xf32> to vector<8x64xf32>
    %107 = math.tanh %106 : vector<8x64xf32>
    %108 = vector.extract_strided_slice %105 {offsets = [0, 64], sizes = [8, 64], strides = [1, 1]} : vector<8x192xf32> to vector<8x64xf32>
    %109 = arith.mulf %108, %92 : vector<8x64xf32>
    %110 = vector.extract_strided_slice %105 {offsets = [0, 0], sizes = [8, 64], strides = [1, 1]} : vector<8x192xf32> to vector<8x64xf32>
    %111 = arith.mulf %110, %107 : vector<8x64xf32>
    %112 = arith.addf %109, %111 : vector<8x64xf32>
    %113 = vector.extract_strided_slice %105 {offsets = [0, 128], sizes = [8, 64], strides = [1, 1]} : vector<8x192xf32> to vector<8x64xf32>
    %114 = math.tanh %112 : vector<8x64xf32>
    %115 = arith.mulf %113, %114 : vector<8x64xf32>
    %116 = arith.addf %96, %115 : vector<8x64xf32>
    %c40 = arith.constant 40 : index
    %c0_26 = arith.constant 0 : index
    %117 = vector.load %arg6[%c40, %c0_26] : memref<64x256xf32, #tpu.memory_space<vmem>>, vector<8x256xf32>
    %cst_27 = arith.constant dense<0.000000e+00> : vector<8x256xf32>
    %118 = tpu.matmul %115, %15, %cst_27 {dimension_numbers = #tpu.dot_dimension_numbers<[1], [0], [0], [1], [0, 0, 1, 1], [], []>} : vector<8x64xf32>, vector<64x256xf32>, vector<8x256xf32> -> vector<8x256xf32>
    %119 = arith.addf %117, %118 : vector<8x256xf32>
    %120 = vector.extract_strided_slice %119 {offsets = [0, 0], sizes = [8, 192], strides = [1, 1]} : vector<8x256xf32> to vector<8x192xf32>
    %121 = arith.negf %120 : vector<8x192xf32>
    %122 = math.exp %121 : vector<8x192xf32>
    %cst_28 = arith.constant 1.000000e+00 : f32
    %123 = vector.broadcast %cst_28 : f32 to vector<8x192xf32>
    %124 = arith.addf %123, %122 : vector<8x192xf32>
    %125 = arith.divf %123, %124 : vector<8x192xf32>
    %126 = vector.extract_strided_slice %119 {offsets = [0, 192], sizes = [8, 64], strides = [1, 1]} : vector<8x256xf32> to vector<8x64xf32>
    %127 = math.tanh %126 : vector<8x64xf32>
    %128 = vector.extract_strided_slice %125 {offsets = [0, 64], sizes = [8, 64], strides = [1, 1]} : vector<8x192xf32> to vector<8x64xf32>
    %129 = arith.mulf %128, %112 : vector<8x64xf32>
    %130 = vector.extract_strided_slice %125 {offsets = [0, 0], sizes = [8, 64], strides = [1, 1]} : vector<8x192xf32> to vector<8x64xf32>
    %131 = arith.mulf %130, %127 : vector<8x64xf32>
    %132 = arith.addf %129, %131 : vector<8x64xf32>
    %133 = vector.extract_strided_slice %125 {offsets = [0, 128], sizes = [8, 64], strides = [1, 1]} : vector<8x192xf32> to vector<8x64xf32>
    %134 = math.tanh %132 : vector<8x64xf32>
    %135 = arith.mulf %133, %134 : vector<8x64xf32>
    %136 = arith.addf %116, %135 : vector<8x64xf32>
    %c48 = arith.constant 48 : index
    %c0_29 = arith.constant 0 : index
    %137 = vector.load %arg6[%c48, %c0_29] : memref<64x256xf32, #tpu.memory_space<vmem>>, vector<8x256xf32>
    %cst_30 = arith.constant dense<0.000000e+00> : vector<8x256xf32>
    %138 = tpu.matmul %135, %15, %cst_30 {dimension_numbers = #tpu.dot_dimension_numbers<[1], [0], [0], [1], [0, 0, 1, 1], [], []>} : vector<8x64xf32>, vector<64x256xf32>, vector<8x256xf32> -> vector<8x256xf32>
    %139 = arith.addf %137, %138 : vector<8x256xf32>
    %140 = vector.extract_strided_slice %139 {offsets = [0, 0], sizes = [8, 192], strides = [1, 1]} : vector<8x256xf32> to vector<8x192xf32>
    %141 = arith.negf %140 : vector<8x192xf32>
    %142 = math.exp %141 : vector<8x192xf32>
    %cst_31 = arith.constant 1.000000e+00 : f32
    %143 = vector.broadcast %cst_31 : f32 to vector<8x192xf32>
    %144 = arith.addf %143, %142 : vector<8x192xf32>
    %145 = arith.divf %143, %144 : vector<8x192xf32>
    %146 = vector.extract_strided_slice %139 {offsets = [0, 192], sizes = [8, 64], strides = [1, 1]} : vector<8x256xf32> to vector<8x64xf32>
    %147 = math.tanh %146 : vector<8x64xf32>
    %148 = vector.extract_strided_slice %145 {offsets = [0, 64], sizes = [8, 64], strides = [1, 1]} : vector<8x192xf32> to vector<8x64xf32>
    %149 = arith.mulf %148, %132 : vector<8x64xf32>
    %150 = vector.extract_strided_slice %145 {offsets = [0, 0], sizes = [8, 64], strides = [1, 1]} : vector<8x192xf32> to vector<8x64xf32>
    %151 = arith.mulf %150, %147 : vector<8x64xf32>
    %152 = arith.addf %149, %151 : vector<8x64xf32>
    %153 = vector.extract_strided_slice %145 {offsets = [0, 128], sizes = [8, 64], strides = [1, 1]} : vector<8x192xf32> to vector<8x64xf32>
    %154 = math.tanh %152 : vector<8x64xf32>
    %155 = arith.mulf %153, %154 : vector<8x64xf32>
    %156 = arith.addf %136, %155 : vector<8x64xf32>
    %c56 = arith.constant 56 : index
    %c0_32 = arith.constant 0 : index
    %157 = vector.load %arg6[%c56, %c0_32] : memref<64x256xf32, #tpu.memory_space<vmem>>, vector<8x256xf32>
    %cst_33 = arith.constant dense<0.000000e+00> : vector<8x256xf32>
    %158 = tpu.matmul %155, %15, %cst_33 {dimension_numbers = #tpu.dot_dimension_numbers<[1], [0], [0], [1], [0, 0, 1, 1], [], []>} : vector<8x64xf32>, vector<64x256xf32>, vector<8x256xf32> -> vector<8x256xf32>
    %159 = arith.addf %157, %158 : vector<8x256xf32>
    %160 = vector.extract_strided_slice %159 {offsets = [0, 0], sizes = [8, 192], strides = [1, 1]} : vector<8x256xf32> to vector<8x192xf32>
    %161 = arith.negf %160 : vector<8x192xf32>
    %162 = math.exp %161 : vector<8x192xf32>
    %cst_34 = arith.constant 1.000000e+00 : f32
    %163 = vector.broadcast %cst_34 : f32 to vector<8x192xf32>
    %164 = arith.addf %163, %162 : vector<8x192xf32>
    %165 = arith.divf %163, %164 : vector<8x192xf32>
    %166 = vector.extract_strided_slice %159 {offsets = [0, 192], sizes = [8, 64], strides = [1, 1]} : vector<8x256xf32> to vector<8x64xf32>
    %167 = math.tanh %166 : vector<8x64xf32>
    %168 = vector.extract_strided_slice %165 {offsets = [0, 64], sizes = [8, 64], strides = [1, 1]} : vector<8x192xf32> to vector<8x64xf32>
    %169 = arith.mulf %168, %152 : vector<8x64xf32>
    %170 = vector.extract_strided_slice %165 {offsets = [0, 0], sizes = [8, 64], strides = [1, 1]} : vector<8x192xf32> to vector<8x64xf32>
    %171 = arith.mulf %170, %167 : vector<8x64xf32>
    %172 = arith.addf %169, %171 : vector<8x64xf32>
    %173 = vector.extract_strided_slice %165 {offsets = [0, 128], sizes = [8, 64], strides = [1, 1]} : vector<8x192xf32> to vector<8x64xf32>
    %174 = math.tanh %172 : vector<8x64xf32>
    %175 = arith.mulf %173, %174 : vector<8x64xf32>
    %176 = arith.addf %156, %175 : vector<8x64xf32>
    %177 = vector.extract_strided_slice %35 {offsets = [0, 0], sizes = [8, 32], strides = [1, 1]} : vector<8x64xf32> to vector<8x32xf32>
    %178 = vector.extract_strided_slice %175 {offsets = [0, 32], sizes = [8, 32], strides = [1, 1]} : vector<8x64xf32> to vector<8x32xf32>
    %179 = vector.extract_strided_slice %55 {offsets = [0, 0], sizes = [8, 32], strides = [1, 1]} : vector<8x64xf32> to vector<8x32xf32>
    %180 = vector.extract_strided_slice %155 {offsets = [0, 32], sizes = [8, 32], strides = [1, 1]} : vector<8x64xf32> to vector<8x32xf32>
    %181 = vector.extract_strided_slice %75 {offsets = [0, 0], sizes = [8, 32], strides = [1, 1]} : vector<8x64xf32> to vector<8x32xf32>
    %182 = vector.extract_strided_slice %135 {offsets = [0, 32], sizes = [8, 32], strides = [1, 1]} : vector<8x64xf32> to vector<8x32xf32>
    %183 = vector.extract_strided_slice %95 {offsets = [0, 0], sizes = [8, 32], strides = [1, 1]} : vector<8x64xf32> to vector<8x32xf32>
    %184 = vector.extract_strided_slice %115 {offsets = [0, 32], sizes = [8, 32], strides = [1, 1]} : vector<8x64xf32> to vector<8x32xf32>
    %185 = vector.extract_strided_slice %115 {offsets = [0, 0], sizes = [8, 32], strides = [1, 1]} : vector<8x64xf32> to vector<8x32xf32>
    %186 = vector.extract_strided_slice %95 {offsets = [0, 32], sizes = [8, 32], strides = [1, 1]} : vector<8x64xf32> to vector<8x32xf32>
    %187 = vector.extract_strided_slice %135 {offsets = [0, 0], sizes = [8, 32], strides = [1, 1]} : vector<8x64xf32> to vector<8x32xf32>
    %188 = vector.extract_strided_slice %75 {offsets = [0, 32], sizes = [8, 32], strides = [1, 1]} : vector<8x64xf32> to vector<8x32xf32>
    %189 = vector.extract_strided_slice %155 {offsets = [0, 0], sizes = [8, 32], strides = [1, 1]} : vector<8x64xf32> to vector<8x32xf32>
    %190 = vector.extract_strided_slice %55 {offsets = [0, 32], sizes = [8, 32], strides = [1, 1]} : vector<8x64xf32> to vector<8x32xf32>
    %191 = vector.extract_strided_slice %175 {offsets = [0, 0], sizes = [8, 32], strides = [1, 1]} : vector<8x64xf32> to vector<8x32xf32>
    %192 = vector.extract_strided_slice %35 {offsets = [0, 32], sizes = [8, 32], strides = [1, 1]} : vector<8x64xf32> to vector<8x32xf32>
    %193 = tpu.concatenate %177, %178, %179, %180, %181, %182, %183, %184, %185, %186, %187, %188, %189, %190, %191, %192 in 1 : vector<8x32xf32>, vector<8x32xf32>, vector<8x32xf32>, vector<8x32xf32>, vector<8x32xf32>, vector<8x32xf32>, vector<8x32xf32>, vector<8x32xf32>, vector<8x32xf32>, vector<8x32xf32>, vector<8x32xf32>, vector<8x32xf32>, vector<8x32xf32>, vector<8x32xf32>, vector<8x32xf32>, vector<8x32xf32> -> vector<8x512xf32>
    %c0_35 = arith.constant 0 : index
    %c0_36 = arith.constant 0 : index
    %194 = vector.load %arg4[%c0_35, %c0_36] : memref<8x512xf32, #tpu.memory_space<vmem>>, vector<8x512xf32>
    tpu.vector_store %arg4[%c0_35, %c0_36], %193 {strides = array<i32>} : memref<8x512xf32, #tpu.memory_space<vmem>>, vector<8x512xf32>,
    %cst_37 = arith.constant 1.250000e-01 : f32
    %195 = vector.broadcast %cst_37 : f32 to vector<8x64xf32>
    %196 = arith.mulf %176, %195 : vector<8x64xf32>
    %c0_38 = arith.constant 0 : index
    %c0_39 = arith.constant 0 : index
    %197 = vector.load %arg5[%c0_38, %c0_39] : memref<8x64xf32, #tpu.memory_space<vmem>>, vector<8x64xf32>
    tpu.vector_store %arg5[%c0_38, %c0_39], %196 {strides = array<i32>} : memref<8x64xf32, #tpu.memory_space<vmem>>, vector<8x64xf32>,
    return
  }
}

</mosaic_0001>

<llo_original>
// kernel: bilstm_forward.1
$region0: #{bilstm_forward.1}
  #allocation0 [shape = 'u32[]', space=smem, size = 0x4, offset = 0x4, fixed_abs, tag = 'smem constant byte address 0x4 - core index']
  #allocation1 [shape = 'u32[144,128]{1,0:T(1,128)}', space=vmem, size = 0x12000, scoped, tag = 'internal scratch']
  #allocation2 [shape = 'f32[64,256]{1,0:T(8,128)}', space=vmem, size = 0x10000, scoped, tag = 'scratch operand']
  %s0 = inlined_call_operand.vmem [shape: s32[64,1], index: 0, kind: input, shape index: {}]
  %s1 = inlined_call_operand.vmem [shape: s32[64,1], index: 1, kind: input, shape index: {}]
  %s2 = inlined_call_operand.vmem [shape: f32[256,256], index: 2, kind: input, shape index: {}]
  %s3 = inlined_call_operand.vmem [shape: f32[64,256], index: 3, kind: input, shape index: {}]
  %s4 = inlined_call_operand.vmem [shape: f32[8,512], index: 4, kind: output, shape index: {0}]
  %s5 = inlined_call_operand.vmem [shape: f32[8,64], index: 5, kind: output, shape index: {1}]
  %6 = xla_tuple %s4, %s5
  %s7 = sld [smem:[#allocation0]]
  $region34: #{bilstm_forward.1} parent=0
    _
  %s9 = ssub.s32 1, %s7
  %s10 = scalar_select 0, %s9, %s7
  // Predicated region
  $region2: #{bilstm_forward.1} parent=0 // pred_check
    _
  $region3: #{bilstm_forward.1} parent=0 // pred_check_branch
    %12 = sbr.rel (0) target = $region5
  $region4: #{bilstm_forward.1} parent=0 // pred_region
    _
  $region5: #{bilstm_forward.1} parent=0 // pred_fallthru
    _
  // Predicated region
  $region6: #{bilstm_forward.1} parent=0 // pred_check
    _
  $region7: #{bilstm_forward.1} parent=0 // pred_check_branch
    %14 = sbr.rel (0) target = $region9
  $region8: #{bilstm_forward.1} parent=0 // pred_region
    _
  $region9: #{bilstm_forward.1} parent=0 // pred_fallthru
    _
  // Predicated region
  $region10: #{bilstm_forward.1} parent=0 // pred_check
    _
  $region11: #{bilstm_forward.1} parent=0 // pred_check_branch
    %16 = sbr.rel (0) target = $region13
  $region12: #{bilstm_forward.1} parent=0 // pred_region
    _
  $region13: #{bilstm_forward.1} parent=0 // pred_fallthru
    _
  // Predicated region
  $region14: #{bilstm_forward.1} parent=0 // pred_check
    _
  $region15: #{bilstm_forward.1} parent=0 // pred_check_branch
    %18 = sbr.rel (0) target = $region17
  $region16: #{bilstm_forward.1} parent=0 // pred_region
    _
  $region17: #{bilstm_forward.1} parent=0 // pred_fallthru
    _
  %v19 = vlaneseq
  %v20 = vand.u32 %v19, 127
  %v21 = vadd.s32 %v20, 128
  %v22 = vld [vmem:[%s0] sm:$0xff]
  %v23 = vld [vmem:[%s0 + $0x8] sm:$0xff]
  %v24 = vld [vmem:[%s0 + $0x10] sm:$0xff]
  %v25 = vld [vmem:[%s0 + $0x18] sm:$0xff]
  %v26 = vld [vmem:[%s0 + $0x20] sm:$0xff]
  %v27 = vld [vmem:[%s0 + $0x28] sm:$0xff]
  %v28 = vld [vmem:[%s0 + $0x30] sm:$0xff]
  %v29 = vld [vmem:[%s0 + $0x38] sm:$0xff]
  %30 = vset.pattern.permute.xlu0 0
  %31 = vperm.xlu0 %30, %v22
  %v32 = vpop.permute.xlu0 %31
  %33 = vset.pattern.permute.xlu0 0
  %34 = vperm.xlu0 %33, %v23
  %v35 = vpop.permute.xlu0 %34
  %36 = vset.pattern.permute.xlu0 0
  %37 = vperm.xlu0 %36, %v24
  %v38 = vpop.permute.xlu0 %37
  %39 = vset.pattern.permute.xlu0 0
  %40 = vperm.xlu0 %39, %v25
  %v41 = vpop.permute.xlu0 %40
  %42 = vset.pattern.permute.xlu0 0
  %43 = vperm.xlu0 %42, %v26
  %v44 = vpop.permute.xlu0 %43
  %45 = vset.pattern.permute.xlu0 0
  %46 = vperm.xlu0 %45, %v27
  %v47 = vpop.permute.xlu0 %46
  %48 = vset.pattern.permute.xlu0 0
  %49 = vperm.xlu0 %48, %v28
  %v50 = vpop.permute.xlu0 %49
  %51 = vset.pattern.permute.xlu0 0
  %52 = vperm.xlu0 %51, %v29
  %v53 = vpop.permute.xlu0 %52
  %vm54 = vcmp.eq.s32.totalorder %v20, %v32
  %vm55 = vcmp.eq.s32.totalorder %v21, %v32
  %vm56 = vcmp.eq.s32.totalorder %v20, %v35
  %vm57 = vcmp.eq.s32.totalorder %v21, %v35
  %vm58 = vcmp.eq.s32.totalorder %v20, %v38
  %vm59 = vcmp.eq.s32.totalorder %v21, %v38
  %vm60 = vcmp.eq.s32.totalorder %v20, %v41
  %vm61 = vcmp.eq.s32.totalorder %v21, %v41
  %vm62 = vcmp.eq.s32.totalorder %v20, %v44
  %vm63 = vcmp.eq.s32.totalorder %v21, %v44
  %vm64 = vcmp.eq.s32.totalorder %v20, %v47
  %vm65 = vcmp.eq.s32.totalorder %v21, %v47
  %vm66 = vcmp.eq.s32.totalorder %v20, %v50
  %vm67 = vcmp.eq.s32.totalorder %v21, %v50
  %vm68 = vcmp.eq.s32.totalorder %v20, %v53
  %vm69 = vcmp.eq.s32.totalorder %v21, %v53
  %v70 = vld [vmem:[%s1] sm:$0xff]
  %v71 = vld [vmem:[%s1 + $0x8] sm:$0xff]
  %v72 = vld [vmem:[%s1 + $0x10] sm:$0xff]
  %v73 = vld [vmem:[%s1 + $0x18] sm:$0xff]
  %v74 = vld [vmem:[%s1 + $0x20] sm:$0xff]
  %v75 = vld [vmem:[%s1 + $0x28] sm:$0xff]
  %v76 = vld [vmem:[%s1 + $0x30] sm:$0xff]
  %v77 = vld [vmem:[%s1 + $0x38] sm:$0xff]
  %v78 = vadd.s32 %v70, 128
  %v79 = vadd.s32 %v71, 128
  %v80 = vadd.s32 %v72, 128
  %v81 = vadd.s32 %v73, 128
  %v82 = vadd.s32 %v74, 128
  %v83 = vadd.s32 %v75, 128
  %v84 = vadd.s32 %v76, 128
  %v85 = vadd.s32 %v77, 128
  %86 = vset.pattern.permute.xlu0 0
  %87 = vperm.xlu0 %86, %v78
  %v88 = vpop.permute.xlu0 %87
  %89 = vset.pattern.permute.xlu0 0
  %90 = vperm.xlu0 %89, %v79
  %v91 = vpop.permute.xlu0 %90
  %92 = vset.pattern.permute.xlu0 0
  %93 = vperm.xlu0 %92, %v80
  %v94 = vpop.permute.xlu0 %93
  %95 = vset.pattern.permute.xlu0 0
  %96 = vperm.xlu0 %95, %v81
  %v97 = vpop.permute.xlu0 %96
  %98 = vset.pattern.permute.xlu0 0
  %99 = vperm.xlu0 %98, %v82
  %v100 = vpop.permute.xlu0 %99
  %101 = vset.pattern.permute.xlu0 0
  %102 = vperm.xlu0 %101, %v83
  %v103 = vpop.permute.xlu0 %102
  %104 = vset.pattern.permute.xlu0 0
  %105 = vperm.xlu0 %104, %v84
  %v106 = vpop.permute.xlu0 %105
  %107 = vset.pattern.permute.xlu0 0
  %108 = vperm.xlu0 %107, %v85
  %v109 = vpop.permute.xlu0 %108
  %vm110 = vcmp.eq.s32.totalorder %v20, %v88
  %vm111 = vcmp.eq.s32.totalorder %v21, %v88
  %vm112 = vcmp.eq.s32.totalorder %v20, %v91
  %vm113 = vcmp.eq.s32.totalorder %v21, %v91
  %vm114 = vcmp.eq.s32.totalorder %v20, %v94
  %vm115 = vcmp.eq.s32.totalorder %v21, %v94
  %vm116 = vcmp.eq.s32.totalorder %v20, %v97
  %vm117 = vcmp.eq.s32.totalorder %v21, %v97
  %vm118 = vcmp.eq.s32.totalorder %v20, %v100
  %vm119 = vcmp.eq.s32.totalorder %v21, %v100
  %vm120 = vcmp.eq.s32.totalorder %v20, %v103
  %vm121 = vcmp.eq.s32.totalorder %v21, %v103
  %vm122 = vcmp.eq.s32.totalorder %v20, %v106
  %vm123 = vcmp.eq.s32.totalorder %v21, %v106
  %vm124 = vcmp.eq.s32.totalorder %v20, %v109
  %vm125 = vcmp.eq.s32.totalorder %v21, %v109
  %vm126 = vmor %vm54, %vm110
  %vm127 = vmor %vm55, %vm111
  %vm128 = vmor %vm56, %vm112
  %vm129 = vmor %vm57, %vm113
  %vm130 = vmor %vm58, %vm114
  %vm131 = vmor %vm59, %vm115
  %vm132 = vmor %vm60, %vm116
  %vm133 = vmor %vm61, %vm117
  %vm134 = vmor %vm62, %vm118
  %vm135 = vmor %vm63, %vm119
  %vm136 = vmor %vm64, %vm120
  %vm137 = vmor %vm65, %vm121
  %vm138 = vmor %vm66, %vm122
  %vm139 = vmor %vm67, %vm123
  %vm140 = vmor %vm68, %vm124
  %vm141 = vmor %vm69, %vm125
  %v142 = vsel %vm126, 1, 0
  %v143 = vsel %vm127, 1, 0
  %v144 = vsel %vm128, 1, 0
  %v145 = vsel %vm129, 1, 0
  %v146 = vsel %vm130, 1, 0
  %v147 = vsel %vm131, 1, 0
  %v148 = vsel %vm132, 1, 0
  %v149 = vsel %vm133, 1, 0
  %v150 = vsel %vm134, 1, 0
  %v151 = vsel %vm135, 1, 0
  %v152 = vsel %vm136, 1, 0
  %v153 = vsel %vm137, 1, 0
  %v154 = vsel %vm138, 1, 0
  %v155 = vsel %vm139, 1, 0
  %v156 = vsel %vm140, 1, 0
  %v157 = vsel %vm141, 1, 0
  %v158 = vcvt.s32.f32 %v142
  %v159 = vcvt.s32.f32 %v143
  %v160 = vcvt.s32.f32 %v144
  %v161 = vcvt.s32.f32 %v145
  %v162 = vcvt.s32.f32 %v146
  %v163 = vcvt.s32.f32 %v147
  %v164 = vcvt.s32.f32 %v148
  %v165 = vcvt.s32.f32 %v149
  %v166 = vcvt.s32.f32 %v150
  %v167 = vcvt.s32.f32 %v151
  %v168 = vcvt.s32.f32 %v152
  %v169 = vcvt.s32.f32 %v153
  %v170 = vcvt.s32.f32 %v154
  %v171 = vcvt.s32.f32 %v155
  %v172 = vcvt.s32.f32 %v156
  %v173 = vcvt.s32.f32 %v157
  %v174 = vld [vmem:[%s2] sm:$0xff]
  %v175 = vld [vmem:[%s2 + $0x8] sm:$0xff]
  %v176 = vld [vmem:[%s2 + $0x10] sm:$0xff]
  %v177 = vld [vmem:[%s2 + $0x18] sm:$0xff]
  %v178 = vld [vmem:[%s2 + $0x20] sm:$0xff]
  %v179 = vld [vmem:[%s2 + $0x28] sm:$0xff]
  %v180 = vld [vmem:[%s2 + $0x30] sm:$0xff]
  %v181 = vld [vmem:[%s2 + $0x38] sm:$0xff]
  %v182 = vld [vmem:[%s2 + $0x40] sm:$0xff]
  %v183 = vld [vmem:[%s2 + $0x48] sm:$0xff]
  %v184 = vld [vmem:[%s2 + $0x50] sm:$0xff]
  %v185 = vld [vmem:[%s2 + $0x58] sm:$0xff]
  %v186 = vld [vmem:[%s2 + $0x60] sm:$0xff]
  %v187 = vld [vmem:[%s2 + $0x68] sm:$0xff]
  %v188 = vld [vmem:[%s2 + $0x70] sm:$0xff]
  %v189 = vld [vmem:[%s2 + $0x78] sm:$0xff]
  %v190 = vld [vmem:[%s2 + $0x80] sm:$0xff]
  %v191 = vld [vmem:[%s2 + $0x88] sm:$0xff]
  %v192 = vld [vmem:[%s2 + $0x90] sm:$0xff]
  %v193 = vld [vmem:[%s2 + $0x98] sm:$0xff]
  %v194 = vld [vmem:[%s2 + $0xa0] sm:$0xff]
  %v195 = vld [vmem:[%s2 + $0xa8] sm:$0xff]
  %v196 = vld [vmem:[%s2 + $0xb0] sm:$0xff]
  %v197 = vld [vmem:[%s2 + $0xb8] sm:$0xff]
  %v198 = vld [vmem:[%s2 + $0xc0] sm:$0xff]
  %v199 = vld [vmem:[%s2 + $0xc8] sm:$0xff]
  %v200 = vld [vmem:[%s2 + $0xd0] sm:$0xff]
  %v201 = vld [vmem:[%s2 + $0xd8] sm:$0xff]
  %v202 = vld [vmem:[%s2 + $0xe0] sm:$0xff]
  %v203 = vld [vmem:[%s2 + $0xe8] sm:$0xff]
  %v204 = vld [vmem:[%s2 + $0xf0] sm:$0xff]
  %v205 = vld [vmem:[%s2 + $0xf8] sm:$0xff]
  %v206 = vld [vmem:[%s2 + $0x100] sm:$0xff]
  %v207 = vld [vmem:[%s2 + $0x108] sm:$0xff]
  %v208 = vld [vmem:[%s2 + $0x110] sm:$0xff]
  %v209 = vld [vmem:[%s2 + $0x118] sm:$0xff]
  %v210 = vld [vmem:[%s2 + $0x120] sm:$0xff]
  %v211 = vld [vmem:[%s2 + $0x128] sm:$0xff]
  %v212 = vld [vmem:[%s2 + $0x130] sm:$0xff]
  %v213 = vld [vmem:[%s2 + $0x138] sm:$0xff]
  %v214 = vld [vmem:[%s2 + $0x140] sm:$0xff]
  %v215 = vld [vmem:[%s2 + $0x148] sm:$0xff]
  %v216 = vld [vmem:[%s2 + $0x150] sm:$0xff]
  %v217 = vld [vmem:[%s2 + $0x158] sm:$0xff]
  %v218 = vld [vmem:[%s2 + $0x160] sm:$0xff]
  %v219 = vld [vmem:[%s2 + $0x168] sm:$0xff]
  %v220 = vld [vmem:[%s2 + $0x170] sm:$0xff]
  %v221 = vld [vmem:[%s2 + $0x178] sm:$0xff]
  %v222 = vld [vmem:[%s2 + $0x180] sm:$0xff]
  %v223 = vld [vmem:[%s2 + $0x188] sm:$0xff]
  %v224 = vld [vmem:[%s2 + $0x190] sm:$0xff]
  %v225 = vld [vmem:[%s2 + $0x198] sm:$0xff]
  %v226 = vld [vmem:[%s2 + $0x1a0] sm:$0xff]
  %v227 = vld [vmem:[%s2 + $0x1a8] sm:$0xff]
  %v228 = vld [vmem:[%s2 + $0x1b0] sm:$0xff]
  %v229 = vld [vmem:[%s2 + $0x1b8] sm:$0xff]
  %v230 = vld [vmem:[%s2 + $0x1c0] sm:$0xff]
  %v231 = vld [vmem:[%s2 + $0x1c8] sm:$0xff]
  %v232 = vld [vmem:[%s2 + $0x1d0] sm:$0xff]
  %v233 = vld [vmem:[%s2 + $0x1d8] sm:$0xff]
  %v234 = vld [vmem:[%s2 + $0x1e0] sm:$0xff]
  %v235 = vld [vmem:[%s2 + $0x1e8] sm:$0xff]
  %v236 = vld [vmem:[%s2 + $0x1f0] sm:$0xff]
  %v237 = vld [vmem:[%s2 + $0x1f8] sm:$0xff]
  %238 = vmatprep.subr.mxu0 %v205
  %239 = vmatpush1.msra.mxu0 %v204
  %240 = vmatprep.subr.mxu0 %v203
  %241 = vmatpush1.msra.mxu0 %v202
  %242 = vmatprep.subr.mxu0 %v201
  %243 = vmatpush1.msra.mxu0 %v200
  %244 = vmatprep.subr.mxu0 %v199
  %245 = vmatpush1.msra.mxu0 %v198
  %246 = vmatprep.subr.mxu0 %v197
  %247 = vmatpush1.msra.mxu0 %v196
  %248 = vmatprep.subr.mxu0 %v195
  %249 = vmatpush1.msra.mxu0 %v194
  %250 = vmatprep.subr.mxu0 %v193
  %251 = vmatpush1.msra.mxu0 %v192
  %252 = vmatprep.subr.mxu0 %v191
  %253 = vmatpush1.msra.mxu0 %v190
  %254 = vmatprep.subr.mxu0 %v189
  %255 = vmatpush1.msra.mxu0 %v188
  %256 = vmatprep.subr.mxu0 %v187
  %257 = vmatpush1.msra.mxu0 %v186
  %258 = vmatprep.subr.mxu0 %v185
  %259 = vmatpush1.msra.mxu0 %v184
  %260 = vmatprep.subr.mxu0 %v183
  %261 = vmatpush1.msra.mxu0 %v182
  %262 = vmatprep.subr.mxu0 %v181
  %263 = vmatpush1.msra.mxu0 %v180
  %264 = vmatprep.subr.mxu0 %v179
  %265 = vmatpush1.msra.mxu0 %v178
  %266 = vmatprep.subr.mxu0 %v177
  %267 = vmatpush1.msra.mxu0 %v176
  %268 = vmatprep.subr.mxu0 %v175
  %269 = vmatpush1.msra.mxu0 %v174
  %270 = vmatprep.subr.mxu0 %v237
  %271 = vmatpush2.msra.mxu0 %v236
  %272 = vmatprep.subr.mxu0 %v235
  %273 = vmatpush2.msra.mxu0 %v234
  %274 = vmatprep.subr.mxu0 %v233
  %275 = vmatpush2.msra.mxu0 %v232
  %276 = vmatprep.subr.mxu0 %v231
  %277 = vmatpush2.msra.mxu0 %v230
  %278 = vmatprep.subr.mxu0 %v229
  %279 = vmatpush2.msra.mxu0 %v228
  %280 = vmatprep.subr.mxu0 %v227
  %281 = vmatpush2.msra.mxu0 %v226
  %282 = vmatprep.subr.mxu0 %v225
  %283 = vmatpush2.msra.mxu0 %v224
  %284 = vmatprep.subr.mxu0 %v223
  %285 = vmatpush2.msra.mxu0 %v222
  %286 = vmatprep.subr.mxu0 %v221
  %287 = vmatpush2.msra.mxu0 %v220
  %288 = vmatprep.subr.mxu0 %v219
  %289 = vmatpush2.msra.mxu0 %v218
  %290 = vmatprep.subr.mxu0 %v217
  %291 = vmatpush2.msra.mxu0 %v216
  %292 = vmatprep.subr.mxu0 %v215
  %293 = vmatpush2.msra.mxu0 %v214
  %294 = vmatprep.subr.mxu0 %v213
  %295 = vmatpush2.msra.mxu0 %v212
  %296 = vmatprep.subr.mxu0 %v211
  %297 = vmatpush2.msra.mxu0 %v210
  %298 = vmatprep.subr.mxu0 %v209
  %299 = vmatpush2.msra.mxu0 %v208
  %300 = vmatprep.subr.mxu0 %v207
  %301 = vmatpush2.msra.mxu0 %v206
  %302 = vmatprep.mubr.f32.mxu0 %v159
  %303 = vmatmul.mubr.f32.gmra.mxu0 %v158
  %v304 = vpop.f32.mrf.mxu0
  %v305 = vadd.f32 0.0, %v304
  %v306 = vpop.f32.mrf.mxu0
  %v307 = vadd.f32 0.0, %v306
  %308 = vmatprep.mubr.f32.mxu0 %v161
  %309 = vmatmul.mubr.f32.gmra.mxu0 %v160
  %v310 = vpop.f32.mrf.mxu0
  %v311 = vadd.f32 0.0, %v310
  %v312 = vpop.f32.mrf.mxu0
  %v313 = vadd.f32 0.0, %v312
  %314 = vmatprep.mubr.f32.mxu0 %v163
  %315 = vmatmul.mubr.f32.gmra.mxu0 %v162
  %v316 = vpop.f32.mrf.mxu0
  %v317 = vadd.f32 0.0, %v316
  %v318 = vpop.f32.mrf.mxu0
  %v319 = vadd.f32 0.0, %v318
  %320 = vmatprep.mubr.f32.mxu0 %v165
  %321 = vmatmul.mubr.f32.gmra.mxu0 %v164
  %v322 = vpop.f32.mrf.mxu0
  %v323 = vadd.f32 0.0, %v322
  %v324 = vpop.f32.mrf.mxu0
  %v325 = vadd.f32 0.0, %v324
  %326 = vmatprep.mubr.f32.mxu0 %v167
  %327 = vmatmul.mubr.f32.gmra.mxu0 %v166
  %v328 = vpop.f32.mrf.mxu0
  %v329 = vadd.f32 0.0, %v328
  %v330 = vpop.f32.mrf.mxu0
  %v331 = vadd.f32 0.0, %v330
  %332 = vmatprep.mubr.f32.mxu0 %v169
  %333 = vmatmul.mubr.f32.gmra.mxu0 %v168
  %v334 = vpop.f32.mrf.mxu0
  %v335 = vadd.f32 0.0, %v334
  %v336 = vpop.f32.mrf.mxu0
  %v337 = vadd.f32 0.0, %v336
  %338 = vmatprep.mubr.f32.mxu0 %v171
  %339 = vmatmul.mubr.f32.gmra.mxu0 %v170
  %v340 = vpop.f32.mrf.mxu0
  %v341 = vadd.f32 0.0, %v340
  %v342 = vpop.f32.mrf.mxu0
  %v343 = vadd.f32 0.0, %v342
  %344 = vmatprep.mubr.f32.mxu0 %v173
  %345 = vmatmul.mubr.f32.gmra.mxu0 %v172
  %v346 = vpop.f32.mrf.mxu0
  %v347 = vadd.f32 0.0, %v346
  %v348 = vpop.f32.mrf.mxu0
  %v349 = vadd.f32 0.0, %v348
  %350 = vdwg.mxu0
  %351 = vst [vmem:[#allocation2] sm:$0xff] %v305
  %352 = vst [vmem:[#allocation2 + $0x8] sm:$0xff] %v307
  %353 = vst [vmem:[#allocation2 + $0x10] sm:$0xff] %v311
  %354 = vst [vmem:[#allocation2 + $0x18] sm:$0xff] %v313
  %355 = vst [vmem:[#allocation2 + $0x20] sm:$0xff] %v317
  %356 = vst [vmem:[#allocation2 + $0x28] sm:$0xff] %v319
  %357 = vst [vmem:[#allocation2 + $0x30] sm:$0xff] %v323
  %358 = vst [vmem:[#allocation2 + $0x38] sm:$0xff] %v325
  %359 = vst [vmem:[#allocation2 + $0x40] sm:$0xff] %v329
  %360 = vst [vmem:[#allocation2 + $0x48] sm:$0xff] %v331
  %361 = vst [vmem:[#allocation2 + $0x50] sm:$0xff] %v335
  %362 = vst [vmem:[#allocation2 + $0x58] sm:$0xff] %v337
  %363 = vst [vmem:[#allocation2 + $0x60] sm:$0xff] %v341
  %364 = vst [vmem:[#allocation2 + $0x68] sm:$0xff] %v343
  %365 = vst [vmem:[#allocation2 + $0x70] sm:$0xff] %v347
  %366 = vst [vmem:[#allocation2 + $0x78] sm:$0xff] %v349
  %v367 = vld [vmem:[%s3] sm:$0xff]
  %v368 = vld [vmem:[%s3 + $0x8] sm:$0xff]
  %v369 = vld [vmem:[%s3 + $0x10] sm:$0xff]
  %v370 = vld [vmem:[%s3 + $0x18] sm:$0xff]
  %v371 = vld [vmem:[%s3 + $0x20] sm:$0xff]
  %v372 = vld [vmem:[%s3 + $0x28] sm:$0xff]
  %v373 = vld [vmem:[%s3 + $0x30] sm:$0xff]
  %v374 = vld [vmem:[%s3 + $0x38] sm:$0xff]
  %v375 = vld [vmem:[%s3 + $0x40] sm:$0xff]
  %v376 = vld [vmem:[%s3 + $0x48] sm:$0xff]
  %v377 = vld [vmem:[%s3 + $0x50] sm:$0xff]
  %v378 = vld [vmem:[%s3 + $0x58] sm:$0xff]
  %v379 = vld [vmem:[%s3 + $0x60] sm:$0xff]
  %v380 = vld [vmem:[%s3 + $0x68] sm:$0xff]
  %v381 = vld [vmem:[%s3 + $0x70] sm:$0xff]
  %v382 = vld [vmem:[%s3 + $0x78] sm:$0xff]
  %v383 = vld [vmem:[#allocation2] sm:$0xff]
  %v384 = vld [vmem:[#allocation2 + $0x8] sm:$0xff]
  %vm385 = vcmask 523264
  %v387 = vsel %vm385, 0.0, 0
  %389 = vmatprep.subr.mxu0 0.0
  %390 = vmatpush1.msra.mxu0 0.0
  %391 = vmatprep.subr.mxu0 0.0
  %392 = vmatpush1.msra.mxu0 0.0
  %393 = vmatprep.subr.mxu0 0.0
  %394 = vmatpush1.msra.mxu0 0.0
  %395 = vmatprep.subr.mxu0 0.0
  %396 = vmatpush1.msra.mxu0 0.0
  %397 = vmatprep.subr.mxu0 0.0
  %398 = vmatpush1.msra.mxu0 0.0
  %399 = vmatprep.subr.mxu0 0.0
  %400 = vmatpush1.msra.mxu0 0.0
  %401 = vmatprep.subr.mxu0 0.0
  %402 = vmatpush1.msra.mxu0 0.0
  %403 = vmatprep.subr.mxu0 0.0
  %404 = vmatpush1.msra.mxu0 0.0
  %405 = vmatprep.subr.mxu0 %v382
  %406 = vmatpush1.msra.mxu0 %v381
  %407 = vmatprep.subr.mxu0 %v380
  %408 = vmatpush1.msra.mxu0 %v379
  %409 = vmatprep.subr.mxu0 %v378
  %410 = vmatpush1.msra.mxu0 %v377
  %411 = vmatprep.subr.mxu0 %v376
  %412 = vmatpush1.msra.mxu0 %v375
  %413 = vmatprep.subr.mxu0 %v374
  %414 = vmatpush1.msra.mxu0 %v373
  %415 = vmatprep.subr.mxu0 %v372
  %416 = vmatpush1.msra.mxu0 %v371
  %417 = vmatprep.subr.mxu0 %v370
  %418 = vmatpush1.msra.mxu0 %v369
  %419 = vmatprep.subr.mxu0 %v368
  %420 = vmatpush1.msra.mxu0 %v367
  %421 = vmatprep.subr.mxu0 0.0
  %422 = vmatpush2.msra.mxu0 0.0
  %423 = vmatprep.subr.mxu0 0.0
  %424 = vmatpush2.msra.mxu0 0.0
  %425 = vmatprep.subr.mxu0 0.0
  %426 = vmatpush2.msra.mxu0 0.0
  %427 = vmatprep.subr.mxu0 0.0
  %428 = vmatpush2.msra.mxu0 0.0
  %429 = vmatprep.subr.mxu0 0.0
  %430 = vmatpush2.msra.mxu0 0.0
  %431 = vmatprep.subr.mxu0 0.0
  %432 = vmatpush2.msra.mxu0 0.0
  %433 = vmatprep.subr.mxu0 0.0
  %434 = vmatpush2.msra.mxu0 0.0
  %435 = vmatprep.subr.mxu0 0.0
  %436 = vmatpush2.msra.mxu0 0.0
  %437 = vmatprep.subr.mxu0 0.0
  %438 = vmatpush2.msra.mxu0 0.0
  %439 = vmatprep.subr.mxu0 0.0
  %440 = vmatpush2.msra.mxu0 0.0
  %441 = vmatprep.subr.mxu0 0.0
  %442 = vmatpush2.msra.mxu0 0.0
  %443 = vmatprep.subr.mxu0 0.0
  %444 = vmatpush2.msra.mxu0 0.0
  %445 = vmatprep.subr.mxu0 0.0
  %446 = vmatpush2.msra.mxu0 0.0
  %447 = vmatprep.subr.mxu0 0.0
  %448 = vmatpush2.msra.mxu0 0.0
  %449 = vmatprep.subr.mxu0 0.0
  %450 = vmatpush2.msra.mxu0 0.0
  %451 = vmatprep.subr.mxu0 0.0
  %452 = vmatpush2.msra.mxu0 0.0
  %453 = vmatprep.mubr.f32.mxu0 0.0
  %454 = vmatmul.mubr.f32.gmra.mxu0 %v387
  %v455 = vpop.f32.mrf.mxu0
  %v456 = vadd.f32 0.0, %v455
  %v457 = vpop.f32.mrf.mxu0
  %v458 = vadd.f32 0.0, %v457
  %459 = vdwg.mxu0
  %v460 = vadd.f32 %v383, %v456
  %v461 = vadd.f32 %v384, %v458
  %v462 = vxor.u32 %v460, 2147483648
  %v463 = vxor.u32 %v461, 2147483648
  %v464 = vmul.f32 %v462, 1.442695
  %v465 = vpow.pop %v464
  %v466 = vmul.f32 %v463, 1.442695
  %v467 = vpow.pop %v466
  %v468 = vadd.f32 %v465, 1.0
  %v469 = vadd.f32 %v467, 1.0
  %v470 = vrcp.pop %v468
  %v471 = vmul.f32 1.0, %v470
  %v472 = vrcp.pop %v469
  %v473 = vmul.f32 1.0, %v472
  %v474 = vtanh.pop %v461
  %v475 = vmul.f32 %v471, 0.0
  %477 = vrot.lane.b32.xlu0 %v474, 64
  %v478 = vpop.permute.xlu0 %477
  %v480 = vmul.f32 %v471, %v478
  %482 = vrot.lane.b32.xlu0 %v480, 64
  %v483 = vpop.permute.xlu0 %482
  %v485 = vadd.f32 %v475, %v483
  %v486 = vtanh.pop %v485
  %488 = vrot.lane.b32.xlu0 %v486, 64
  %v489 = vpop.permute.xlu0 %488
  %v491 = vmul.f32 %v473, %v489
  %v492 = vadd.f32 %v491, 0.0
  %v493 = vld [vmem:[#allocation2 + $0x10] sm:$0xff]
  %v494 = vld [vmem:[#allocation2 + $0x18] sm:$0xff]
  %v496 = vsel %vm385, %v491, 0
  %498 = vmatprep.subr.mxu0 0.0
  %499 = vmatpush1.msra.mxu0 0.0
  %500 = vmatprep.subr.mxu0 0.0
  %501 = vmatpush1.msra.mxu0 0.0
  %502 = vmatprep.subr.mxu0 0.0
  %503 = vmatpush1.msra.mxu0 0.0
  %504 = vmatprep.subr.mxu0 0.0
  %505 = vmatpush1.msra.mxu0 0.0
  %506 = vmatprep.subr.mxu0 0.0
  %507 = vmatpush1.msra.mxu0 0.0
  %508 = vmatprep.subr.mxu0 0.0
  %509 = vmatpush1.msra.mxu0 0.0
  %510 = vmatprep.subr.mxu0 0.0
  %511 = vmatpush1.msra.mxu0 0.0
  %512 = vmatprep.subr.mxu0 0.0
  %513 = vmatpush1.msra.mxu0 0.0
  %514 = vmatprep.subr.mxu0 %v382
  %515 = vmatpush1.msra.mxu0 %v381
  %516 = vmatprep.subr.mxu0 %v380
  %517 = vmatpush1.msra.mxu0 %v379
  %518 = vmatprep.subr.mxu0 %v378
  %519 = vmatpush1.msra.mxu0 %v377
  %520 = vmatprep.subr.mxu0 %v376
  %521 = vmatpush1.msra.mxu0 %v375
  %522 = vmatprep.subr.mxu0 %v374
  %523 = vmatpush1.msra.mxu0 %v373
  %524 = vmatprep.subr.mxu0 %v372
  %525 = vmatpush1.msra.mxu0 %v371
  %526 = vmatprep.subr.mxu0 %v370
  %527 = vmatpush1.msra.mxu0 %v369
  %528 = vmatprep.subr.mxu0 %v368
  %529 = vmatpush1.msra.mxu0 %v367
  %530 = vmatprep.subr.mxu0 0.0
  %531 = vmatpush2.msra.mxu0 0.0
  %532 = vmatprep.subr.mxu0 0.0
  %533 = vmatpush2.msra.mxu0 0.0
  %534 = vmatprep.subr.mxu0 0.0
  %535 = vmatpush2.msra.mxu0 0.0
  %536 = vmatprep.subr.mxu0 0.0
  %537 = vmatpush2.msra.mxu0 0.0
  %538 = vmatprep.subr.mxu0 0.0
  %539 = vmatpush2.msra.mxu0 0.0
  %540 = vmatprep.subr.mxu0 0.0
  %541 = vmatpush2.msra.mxu0 0.0
  %542 = vmatprep.subr.mxu0 0.0
  %543 = vmatpush2.msra.mxu0 0.0
  %544 = vmatprep.subr.mxu0 0.0
  %545 = vmatpush2.msra.mxu0 0.0
  %546 = vmatprep.subr.mxu0 0.0
  %547 = vmatpush2.msra.mxu0 0.0
  %548 = vmatprep.subr.mxu0 0.0
  %549 = vmatpush2.msra.mxu0 0.0
  %550 = vmatprep.subr.mxu0 0.0
  %551 = vmatpush2.msra.mxu0 0.0
  %552 = vmatprep.subr.mxu0 0.0
  %553 = vmatpush2.msra.mxu0 0.0
  %554 = vmatprep.subr.mxu0 0.0
  %555 = vmatpush2.msra.mxu0 0.0
  %556 = vmatprep.subr.mxu0 0.0
  %557 = vmatpush2.msra.mxu0 0.0
  %558 = vmatprep.subr.mxu0 0.0
  %559 = vmatpush2.msra.mxu0 0.0
  %560 = vmatprep.subr.mxu0 0.0
  %561 = vmatpush2.msra.mxu0 0.0
  %562 = vmatprep.mubr.f32.mxu0 0.0
  %563 = vmatmul.mubr.f32.gmra.mxu0 %v496
  %v564 = vpop.f32.mrf.mxu0
  %v565 = vadd.f32 0.0, %v564
  %v566 = vpop.f32.mrf.mxu0
  %v567 = vadd.f32 0.0, %v566
  %568 = vdwg.mxu0
  %v569 = vadd.f32 %v493, %v565
  %v570 = vadd.f32 %v494, %v567
  %v571 = vxor.u32 %v569, 2147483648
  %v572 = vxor.u32 %v570, 2147483648
  %v573 = vmul.f32 %v571, 1.442695
  %v574 = vpow.pop %v573
  %v575 = vmul.f32 %v572, 1.442695
  %v576 = vpow.pop %v575
  %v577 = vadd.f32 %v574, 1.0
  %v578 = vadd.f32 %v576, 1.0
  %v579 = vrcp.pop %v577
  %v580 = vmul.f32 1.0, %v579
  %v581 = vrcp.pop %v578
  %v582 = vmul.f32 1.0, %v581
  %v583 = vtanh.pop %v570
  %v584 = vmul.f32 %v580, %v485
  %586 = vrot.lane.b32.xlu0 %v583, 64
  %v587 = vpop.permute.xlu0 %586
  %v589 = vmul.f32 %v580, %v587
  %591 = vrot.lane.b32.xlu0 %v589, 64
  %v592 = vpop.permute.xlu0 %591
  %v594 = vadd.f32 %v584, %v592
  %v595 = vtanh.pop %v594
  %597 = vrot.lane.b32.xlu0 %v595, 64
  %v598 = vpop.permute.xlu0 %597
  %v600 = vmul.f32 %v582, %v598
  %v601 = vadd.f32 %v492, %v600
  %v602 = vld [vmem:[#allocation2 + $0x20] sm:$0xff]
  %v603 = vld [vmem:[#allocation2 + $0x28] sm:$0xff]
  %v605 = vsel %vm385, %v600, 0
  %607 = vmatprep.subr.mxu0 0.0
  %608 = vmatpush1.msra.mxu0 0.0
  %609 = vmatprep.subr.mxu0 0.0
  %610 = vmatpush1.msra.mxu0 0.0
  %611 = vmatprep.subr.mxu0 0.0
  %612 = vmatpush1.msra.mxu0 0.0
  %613 = vmatprep.subr.mxu0 0.0
  %614 = vmatpush1.msra.mxu0 0.0
  %615 = vmatprep.subr.mxu0 0.0
  %616 = vmatpush1.msra.mxu0 0.0
  %617 = vmatprep.subr.mxu0 0.0
  %618 = vmatpush1.msra.mxu0 0.0
  %619 = vmatprep.subr.mxu0 0.0
  %620 = vmatpush1.msra.mxu0 0.0
  %621 = vmatprep.subr.mxu0 0.0
  %622 = vmatpush1.msra.mxu0 0.0
  %623 = vmatprep.subr.mxu0 %v382
  %624 = vmatpush1.msra.mxu0 %v381
  %625 = vmatprep.subr.mxu0 %v380
  %626 = vmatpush1.msra.mxu0 %v379
  %627 = vmatprep.subr.mxu0 %v378
  %628 = vmatpush1.msra.mxu0 %v377
  %629 = vmatprep.subr.mxu0 %v376
  %630 = vmatpush1.msra.mxu0 %v375
  %631 = vmatprep.subr.mxu0 %v374
  %632 = vmatpush1.msra.mxu0 %v373
  %633 = vmatprep.subr.mxu0 %v372
  %634 = vmatpush1.msra.mxu0 %v371
  %635 = vmatprep.subr.mxu0 %v370
  %636 = vmatpush1.msra.mxu0 %v369
  %637 = vmatprep.subr.mxu0 %v368
  %638 = vmatpush1.msra.mxu0 %v367
  %639 = vmatprep.subr.mxu0 0.0
  %640 = vmatpush2.msra.mxu0 0.0
  %641 = vmatprep.subr.mxu0 0.0
  %642 = vmatpush2.msra.mxu0 0.0
  %643 = vmatprep.subr.mxu0 0.0
  %644 = vmatpush2.msra.mxu0 0.0
  %645 = vmatprep.subr.mxu0 0.0
  %646 = vmatpush2.msra.mxu0 0.0
  %647 = vmatprep.subr.mxu0 0.0
  %648 = vmatpush2.msra.mxu0 0.0
  %649 = vmatprep.subr.mxu0 0.0
  %650 = vmatpush2.msra.mxu0 0.0
  %651 = vmatprep.subr.mxu0 0.0
  %652 = vmatpush2.msra.mxu0 0.0
  %653 = vmatprep.subr.mxu0 0.0
  %654 = vmatpush2.msra.mxu0 0.0
  %655 = vmatprep.subr.mxu0 0.0
  %656 = vmatpush2.msra.mxu0 0.0
  %657 = vmatprep.subr.mxu0 0.0
  %658 = vmatpush2.msra.mxu0 0.0
  %659 = vmatprep.subr.mxu0 0.0
  %660 = vmatpush2.msra.mxu0 0.0
  %661 = vmatprep.subr.mxu0 0.0
  %662 = vmatpush2.msra.mxu0 0.0
  %663 = vmatprep.subr.mxu0 0.0
  %664 = vmatpush2.msra.mxu0 0.0
  %665 = vmatprep.subr.mxu0 0.0
  %666 = vmatpush2.msra.mxu0 0.0
  %667 = vmatprep.subr.mxu0 0.0
  %668 = vmatpush2.msra.mxu0 0.0
  %669 = vmatprep.subr.mxu0 0.0
  %670 = vmatpush2.msra.mxu0 0.0
  %671 = vmatprep.mubr.f32.mxu0 0.0
  %672 = vmatmul.mubr.f32.gmra.mxu0 %v605
  %v673 = vpop.f32.mrf.mxu0
  %v674 = vadd.f32 0.0, %v673
  %v675 = vpop.f32.mrf.mxu0
  %v676 = vadd.f32 0.0, %v675
  %677 = vdwg.mxu0
  %v678 = vadd.f32 %v602, %v674
  %v679 = vadd.f32 %v603, %v676
  %v680 = vxor.u32 %v678, 2147483648
  %v681 = vxor.u32 %v679, 2147483648
  %v682 = vmul.f32 %v680, 1.442695
  %v683 = vpow.pop %v682
  %v684 = vmul.f32 %v681, 1.442695
  %v685 = vpow.pop %v684
  %v686 = vadd.f32 %v683, 1.0
  %v687 = vadd.f32 %v685, 1.0
  %v688 = vrcp.pop %v686
  %v689 = vmul.f32 1.0, %v688
  %v690 = vrcp.pop %v687
  %v691 = vmul.f32 1.0, %v690
  %v692 = vtanh.pop %v679
  %v693 = vmul.f32 %v689, %v594
  %695 = vrot.lane.b32.xlu0 %v692, 64
  %v696 = vpop.permute.xlu0 %695
  %v698 = vmul.f32 %v689, %v696
  %700 = vrot.lane.b32.xlu0 %v698, 64
  %v701 = vpop.permute.xlu0 %700
  %v703 = vadd.f32 %v693, %v701
  %v704 = vtanh.pop %v703
  %706 = vrot.lane.b32.xlu0 %v704, 64
  %v707 = vpop.permute.xlu0 %706
  %v709 = vmul.f32 %v691, %v707
  %v710 = vadd.f32 %v601, %v709
  %v711 = vld [vmem:[#allocation2 + $0x30] sm:$0xff]
  %v712 = vld [vmem:[#allocation2 + $0x38] sm:$0xff]
  %v714 = vsel %vm385, %v709, 0
  %716 = vmatprep.subr.mxu0 0.0
  %717 = vmatpush1.msra.mxu0 0.0
  %718 = vmatprep.subr.mxu0 0.0
  %719 = vmatpush1.msra.mxu0 0.0
  %720 = vmatprep.subr.mxu0 0.0
  %721 = vmatpush1.msra.mxu0 0.0
  %722 = vmatprep.subr.mxu0 0.0
  %723 = vmatpush1.msra.mxu0 0.0
  %724 = vmatprep.subr.mxu0 0.0
  %725 = vmatpush1.msra.mxu0 0.0
  %726 = vmatprep.subr.mxu0 0.0
  %727 = vmatpush1.msra.mxu0 0.0
  %728 = vmatprep.subr.mxu0 0.0
  %729 = vmatpush1.msra.mxu0 0.0
  %730 = vmatprep.subr.mxu0 0.0
  %731 = vmatpush1.msra.mxu0 0.0
  %732 = vmatprep.subr.mxu0 %v382
  %733 = vmatpush1.msra.mxu0 %v381
  %734 = vmatprep.subr.mxu0 %v380
  %735 = vmatpush1.msra.mxu0 %v379
  %736 = vmatprep.subr.mxu0 %v378
  %737 = vmatpush1.msra.mxu0 %v377
  %738 = vmatprep.subr.mxu0 %v376
  %739 = vmatpush1.msra.mxu0 %v375
  %740 = vmatprep.subr.mxu0 %v374
  %741 = vmatpush1.msra.mxu0 %v373
  %742 = vmatprep.subr.mxu0 %v372
  %743 = vmatpush1.msra.mxu0 %v371
  %744 = vmatprep.subr.mxu0 %v370
  %745 = vmatpush1.msra.mxu0 %v369
  %746 = vmatprep.subr.mxu0 %v368
  %747 = vmatpush1.msra.mxu0 %v367
  %748 = vmatprep.subr.mxu0 0.0
  %749 = vmatpush2.msra.mxu0 0.0
  %750 = vmatprep.subr.mxu0 0.0
  %751 = vmatpush2.msra.mxu0 0.0
  %752 = vmatprep.subr.mxu0 0.0
  %753 = vmatpush2.msra.mxu0 0.0
  %754 = vmatprep.subr.mxu0 0.0
  %755 = vmatpush2.msra.mxu0 0.0
  %756 = vmatprep.subr.mxu0 0.0
  %757 = vmatpush2.msra.mxu0 0.0
  %758 = vmatprep.subr.mxu0 0.0
  %759 = vmatpush2.msra.mxu0 0.0
  %760 = vmatprep.subr.mxu0 0.0
  %761 = vmatpush2.msra.mxu0 0.0
  %762 = vmatprep.subr.mxu0 0.0
  %763 = vmatpush2.msra.mxu0 0.0
  %764 = vmatprep.subr.mxu0 0.0
  %765 = vmatpush2.msra.mxu0 0.0
  %766 = vmatprep.subr.mxu0 0.0
  %767 = vmatpush2.msra.mxu0 0.0
  %768 = vmatprep.subr.mxu0 0.0
  %769 = vmatpush2.msra.mxu0 0.0
  %770 = vmatprep.subr.mxu0 0.0
  %771 = vmatpush2.msra.mxu0 0.0
  %772 = vmatprep.subr.mxu0 0.0
  %773 = vmatpush2.msra.mxu0 0.0
  %774 = vmatprep.subr.mxu0 0.0
  %775 = vmatpush2.msra.mxu0 0.0
  %776 = vmatprep.subr.mxu0 0.0
  %777 = vmatpush2.msra.mxu0 0.0
  %778 = vmatprep.subr.mxu0 0.0
  %779 = vmatpush2.msra.mxu0 0.0
  %780 = vmatprep.mubr.f32.mxu0 0.0
  %781 = vmatmul.mubr.f32.gmra.mxu0 %v714
  %v782 = vpop.f32.mrf.mxu0
  %v783 = vadd.f32 0.0, %v782
  %v784 = vpop.f32.mrf.mxu0
  %v785 = vadd.f32 0.0, %v784
  %786 = vdwg.mxu0
  %v787 = vadd.f32 %v711, %v783
  %v788 = vadd.f32 %v712, %v785
  %v789 = vxor.u32 %v787, 2147483648
  %v790 = vxor.u32 %v788, 2147483648
  %v791 = vmul.f32 %v789, 1.442695
  %v792 = vpow.pop %v791
  %v793 = vmul.f32 %v790, 1.442695
  %v794 = vpow.pop %v793
  %v795 = vadd.f32 %v792, 1.0
  %v796 = vadd.f32 %v794, 1.0
  %v797 = vrcp.pop %v795
  %v798 = vmul.f32 1.0, %v797
  %v799 = vrcp.pop %v796
  %v800 = vmul.f32 1.0, %v799
  %v801 = vtanh.pop %v788
  %v802 = vmul.f32 %v798, %v703
  %804 = vrot.lane.b32.xlu0 %v801, 64
  %v805 = vpop.permute.xlu0 %804
  %v807 = vmul.f32 %v798, %v805
  %809 = vrot.lane.b32.xlu0 %v807, 64
  %v810 = vpop.permute.xlu0 %809
  %v812 = vadd.f32 %v802, %v810
  %v813 = vtanh.pop %v812
  %815 = vrot.lane.b32.xlu0 %v813, 64
  %v816 = vpop.permute.xlu0 %815
  %v818 = vmul.f32 %v800, %v816
  %v819 = vadd.f32 %v710, %v818
  %v820 = vld [vmem:[#allocation2 + $0x40] sm:$0xff]
  %v821 = vld [vmem:[#allocation2 + $0x48] sm:$0xff]
  %v823 = vsel %vm385, %v818, 0
  %825 = vmatprep.subr.mxu0 0.0
  %826 = vmatpush1.msra.mxu0 0.0
  %827 = vmatprep.subr.mxu0 0.0
  %828 = vmatpush1.msra.mxu0 0.0
  %829 = vmatprep.subr.mxu0 0.0
  %830 = vmatpush1.msra.mxu0 0.0
  %831 = vmatprep.subr.mxu0 0.0
  %832 = vmatpush1.msra.mxu0 0.0
  %833 = vmatprep.subr.mxu0 0.0
  %834 = vmatpush1.msra.mxu0 0.0
  %835 = vmatprep.subr.mxu0 0.0
  %836 = vmatpush1.msra.mxu0 0.0
  %837 = vmatprep.subr.mxu0 0.0
  %838 = vmatpush1.msra.mxu0 0.0
  %839 = vmatprep.subr.mxu0 0.0
  %840 = vmatpush1.msra.mxu0 0.0
  %841 = vmatprep.subr.mxu0 %v382
  %842 = vmatpush1.msra.mxu0 %v381
  %843 = vmatprep.subr.mxu0 %v380
  %844 = vmatpush1.msra.mxu0 %v379
  %845 = vmatprep.subr.mxu0 %v378
  %846 = vmatpush1.msra.mxu0 %v377
  %847 = vmatprep.subr.mxu0 %v376
  %848 = vmatpush1.msra.mxu0 %v375
  %849 = vmatprep.subr.mxu0 %v374
  %850 = vmatpush1.msra.mxu0 %v373
  %851 = vmatprep.subr.mxu0 %v372
  %852 = vmatpush1.msra.mxu0 %v371
  %853 = vmatprep.subr.mxu0 %v370
  %854 = vmatpush1.msra.mxu0 %v369
  %855 = vmatprep.subr.mxu0 %v368
  %856 = vmatpush1.msra.mxu0 %v367
  %857 = vmatprep.subr.mxu0 0.0
  %858 = vmatpush2.msra.mxu0 0.0
  %859 = vmatprep.subr.mxu0 0.0
  %860 = vmatpush2.msra.mxu0 0.0
  %861 = vmatprep.subr.mxu0 0.0
  %862 = vmatpush2.msra.mxu0 0.0
  %863 = vmatprep.subr.mxu0 0.0
  %864 = vmatpush2.msra.mxu0 0.0
  %865 = vmatprep.subr.mxu0 0.0
  %866 = vmatpush2.msra.mxu0 0.0
  %867 = vmatprep.subr.mxu0 0.0
  %868 = vmatpush2.msra.mxu0 0.0
  %869 = vmatprep.subr.mxu0 0.0
  %870 = vmatpush2.msra.mxu0 0.0
  %871 = vmatprep.subr.mxu0 0.0
  %872 = vmatpush2.msra.mxu0 0.0
  %873 = vmatprep.subr.mxu0 0.0
  %874 = vmatpush2.msra.mxu0 0.0
  %875 = vmatprep.subr.mxu0 0.0
  %876 = vmatpush2.msra.mxu0 0.0
  %877 = vmatprep.subr.mxu0 0.0
  %878 = vmatpush2.msra.mxu0 0.0
  %879 = vmatprep.subr.mxu0 0.0
  %880 = vmatpush2.msra.mxu0 0.0
  %881 = vmatprep.subr.mxu0 0.0
  %882 = vmatpush2.msra.mxu0 0.0
  %883 = vmatprep.subr.mxu0 0.0
  %884 = vmatpush2.msra.mxu0 0.0
  %885 = vmatprep.subr.mxu0 0.0
  %886 = vmatpush2.msra.mxu0 0.0
  %887 = vmatprep.subr.mxu0 0.0
  %888 = vmatpush2.msra.mxu0 0.0
  %889 = vmatprep.mubr.f32.mxu0 0.0
  %890 = vmatmul.mubr.f32.gmra.mxu0 %v823
  %v891 = vpop.f32.mrf.mxu0
  %v892 = vadd.f32 0.0, %v891
  %v893 = vpop.f32.mrf.mxu0
  %v894 = vadd.f32 0.0, %v893
  %895 = vdwg.mxu0
  %v896 = vadd.f32 %v820, %v892
  %v897 = vadd.f32 %v821, %v894
  %v898 = vxor.u32 %v896, 2147483648
  %v899 = vxor.u32 %v897, 2147483648
  %v900 = vmul.f32 %v898, 1.442695
  %v901 = vpow.pop %v900
  %v902 = vmul.f32 %v899, 1.442695
  %v903 = vpow.pop %v902
  %v904 = vadd.f32 %v901, 1.0
  %v905 = vadd.f32 %v903, 1.0
  %v906 = vrcp.pop %v904
  %v907 = vmul.f32 1.0, %v906
  %v908 = vrcp.pop %v905
  %v909 = vmul.f32 1.0, %v908
  %v910 = vtanh.pop %v897
  %v911 = vmul.f32 %v907, %v812
  %913 = vrot.lane.b32.xlu0 %v910, 64
  %v914 = vpop.permute.xlu0 %913
  %v916 = vmul.f32 %v907, %v914
  %918 = vrot.lane.b32.xlu0 %v916, 64
  %v919 = vpop.permute.xlu0 %918
  %v921 = vadd.f32 %v911, %v919
  %v922 = vtanh.pop %v921
  %924 = vrot.lane.b32.xlu0 %v922, 64
  %v925 = vpop.permute.xlu0 %924
  %v927 = vmul.f32 %v909, %v925
  %v928 = vadd.f32 %v819, %v927
  %v929 = vld [vmem:[#allocation2 + $0x50] sm:$0xff]
  %v930 = vld [vmem:[#allocation2 + $0x58] sm:$0xff]
  %v932 = vsel %vm385, %v927, 0
  %934 = vmatprep.subr.mxu0 0.0
  %935 = vmatpush1.msra.mxu0 0.0
  %936 = vmatprep.subr.mxu0 0.0
  %937 = vmatpush1.msra.mxu0 0.0
  %938 = vmatprep.subr.mxu0 0.0
  %939 = vmatpush1.msra.mxu0 0.0
  %940 = vmatprep.subr.mxu0 0.0
  %941 = vmatpush1.msra.mxu0 0.0
  %942 = vmatprep.subr.mxu0 0.0
  %943 = vmatpush1.msra.mxu0 0.0
  %944 = vmatprep.subr.mxu0 0.0
  %945 = vmatpush1.msra.mxu0 0.0
  %946 = vmatprep.subr.mxu0 0.0
  %947 = vmatpush1.msra.mxu0 0.0
  %948 = vmatprep.subr.mxu0 0.0
  %949 = vmatpush1.msra.mxu0 0.0
  %950 = vmatprep.subr.mxu0 %v382
  %951 = vmatpush1.msra.mxu0 %v381
  %952 = vmatprep.subr.mxu0 %v380
  %953 = vmatpush1.msra.mxu0 %v379
  %954 = vmatprep.subr.mxu0 %v378
  %955 = vmatpush1.msra.mxu0 %v377
  %956 = vmatprep.subr.mxu0 %v376
  %957 = vmatpush1.msra.mxu0 %v375
  %958 = vmatprep.subr.mxu0 %v374
  %959 = vmatpush1.msra.mxu0 %v373
  %960 = vmatprep.subr.mxu0 %v372
  %961 = vmatpush1.msra.mxu0 %v371
  %962 = vmatprep.subr.mxu0 %v370
  %963 = vmatpush1.msra.mxu0 %v369
  %964 = vmatprep.subr.mxu0 %v368
  %965 = vmatpush1.msra.mxu0 %v367
  %966 = vmatprep.subr.mxu0 0.0
  %967 = vmatpush2.msra.mxu0 0.0
  %968 = vmatprep.subr.mxu0 0.0
  %969 = vmatpush2.msra.mxu0 0.0
  %970 = vmatprep.subr.mxu0 0.0
  %971 = vmatpush2.msra.mxu0 0.0
  %972 = vmatprep.subr.mxu0 0.0
  %973 = vmatpush2.msra.mxu0 0.0
  %974 = vmatprep.subr.mxu0 0.0
  %975 = vmatpush2.msra.mxu0 0.0
  %976 = vmatprep.subr.mxu0 0.0
  %977 = vmatpush2.msra.mxu0 0.0
  %978 = vmatprep.subr.mxu0 0.0
  %979 = vmatpush2.msra.mxu0 0.0
  %980 = vmatprep.subr.mxu0 0.0
  %981 = vmatpush2.msra.mxu0 0.0
  %982 = vmatprep.subr.mxu0 0.0
  %983 = vmatpush2.msra.mxu0 0.0
  %984 = vmatprep.subr.mxu0 0.0
  %985 = vmatpush2.msra.mxu0 0.0
  %986 = vmatprep.subr.mxu0 0.0
  %987 = vmatpush2.msra.mxu0 0.0
  %988 = vmatprep.subr.mxu0 0.0
  %989 = vmatpush2.msra.mxu0 0.0
  %990 = vmatprep.subr.mxu0 0.0
  %991 = vmatpush2.msra.mxu0 0.0
  %992 = vmatprep.subr.mxu0 0.0
  %993 = vmatpush2.msra.mxu0 0.0
  %994 = vmatprep.subr.mxu0 0.0
  %995 = vmatpush2.msra.mxu0 0.0
  %996 = vmatprep.subr.mxu0 0.0
  %997 = vmatpush2.msra.mxu0 0.0
  %998 = vmatprep.mubr.f32.mxu0 0.0
  %999 = vmatmul.mubr.f32.gmra.mxu0 %v932
  %v1000 = vpop.f32.mrf.mxu0
  %v1001 = vadd.f32 0.0, %v1000
  %v1002 = vpop.f32.mrf.mxu0
  %v1003 = vadd.f32 0.0, %v1002
  %1004 = vdwg.mxu0
  %v1005 = vadd.f32 %v929, %v1001
  %v1006 = vadd.f32 %v930, %v1003
  %v1007 = vxor.u32 %v1005, 2147483648
  %v1008 = vxor.u32 %v1006, 2147483648
  %v1009 = vmul.f32 %v1007, 1.442695
  %v1010 = vpow.pop %v1009
  %v1011 = vmul.f32 %v1008, 1.442695
  %v1012 = vpow.pop %v1011
  %v1013 = vadd.f32 %v1010, 1.0
  %v1014 = vadd.f32 %v1012, 1.0
  %v1015 = vrcp.pop %v1013
  %v1016 = vmul.f32 1.0, %v1015
  %v1017 = vrcp.pop %v1014
  %v1018 = vmul.f32 1.0, %v1017
  %v1019 = vtanh.pop %v1006
  %v1020 = vmul.f32 %v1016, %v921
  %1022 = vrot.lane.b32.xlu0 %v1019, 64
  %v1023 = vpop.permute.xlu0 %1022
  %v1025 = vmul.f32 %v1016, %v1023
  %1027 = vrot.lane.b32.xlu0 %v1025, 64
  %v1028 = vpop.permute.xlu0 %1027
  %v1030 = vadd.f32 %v1020, %v1028
  %v1031 = vtanh.pop %v1030
  %1033 = vrot.lane.b32.xlu0 %v1031, 64
  %v1034 = vpop.permute.xlu0 %1033
  %v1036 = vmul.f32 %v1018, %v1034
  %v1037 = vadd.f32 %v928, %v1036
  %v1038 = vld [vmem:[#allocation2 + $0x60] sm:$0xff]
  %v1039 = vld [vmem:[#allocation2 + $0x68] sm:$0xff]
  %v1041 = vsel %vm385, %v1036, 0
  %1043 = vmatprep.subr.mxu0 0.0
  %1044 = vmatpush1.msra.mxu0 0.0
  %1045 = vmatprep.subr.mxu0 0.0
  %1046 = vmatpush1.msra.mxu0 0.0
  %1047 = vmatprep.subr.mxu0 0.0
  %1048 = vmatpush1.msra.mxu0 0.0
  %1049 = vmatprep.subr.mxu0 0.0
  %1050 = vmatpush1.msra.mxu0 0.0
  %1051 = vmatprep.subr.mxu0 0.0
  %1052 = vmatpush1.msra.mxu0 0.0
  %1053 = vmatprep.subr.mxu0 0.0
  %1054 = vmatpush1.msra.mxu0 0.0
  %1055 = vmatprep.subr.mxu0 0.0
  %1056 = vmatpush1.msra.mxu0 0.0
  %1057 = vmatprep.subr.mxu0 0.0
  %1058 = vmatpush1.msra.mxu0 0.0
  %1059 = vmatprep.subr.mxu0 %v382
  %1060 = vmatpush1.msra.mxu0 %v381
  %1061 = vmatprep.subr.mxu0 %v380
  %1062 = vmatpush1.msra.mxu0 %v379
  %1063 = vmatprep.subr.mxu0 %v378
  %1064 = vmatpush1.msra.mxu0 %v377
  %1065 = vmatprep.subr.mxu0 %v376
  %1066 = vmatpush1.msra.mxu0 %v375
  %1067 = vmatprep.subr.mxu0 %v374
  %1068 = vmatpush1.msra.mxu0 %v373
  %1069 = vmatprep.subr.mxu0 %v372
  %1070 = vmatpush1.msra.mxu0 %v371
  %1071 = vmatprep.subr.mxu0 %v370
  %1072 = vmatpush1.msra.mxu0 %v369
  %1073 = vmatprep.subr.mxu0 %v368
  %1074 = vmatpush1.msra.mxu0 %v367
  %1075 = vmatprep.subr.mxu0 0.0
  %1076 = vmatpush2.msra.mxu0 0.0
  %1077 = vmatprep.subr.mxu0 0.0
  %1078 = vmatpush2.msra.mxu0 0.0
  %1079 = vmatprep.subr.mxu0 0.0
  %1080 = vmatpush2.msra.mxu0 0.0
  %1081 = vmatprep.subr.mxu0 0.0
  %1082 = vmatpush2.msra.mxu0 0.0
  %1083 = vmatprep.subr.mxu0 0.0
  %1084 = vmatpush2.msra.mxu0 0.0
  %1085 = vmatprep.subr.mxu0 0.0
  %1086 = vmatpush2.msra.mxu0 0.0
  %1087 = vmatprep.subr.mxu0 0.0
  %1088 = vmatpush2.msra.mxu0 0.0
  %1089 = vmatprep.subr.mxu0 0.0
  %1090 = vmatpush2.msra.mxu0 0.0
  %1091 = vmatprep.subr.mxu0 0.0
  %1092 = vmatpush2.msra.mxu0 0.0
  %1093 = vmatprep.subr.mxu0 0.0
  %1094 = vmatpush2.msra.mxu0 0.0
  %1095 = vmatprep.subr.mxu0 0.0
  %1096 = vmatpush2.msra.mxu0 0.0
  %1097 = vmatprep.subr.mxu0 0.0
  %1098 = vmatpush2.msra.mxu0 0.0
  %1099 = vmatprep.subr.mxu0 0.0
  %1100 = vmatpush2.msra.mxu0 0.0
  %1101 = vmatprep.subr.mxu0 0.0
  %1102 = vmatpush2.msra.mxu0 0.0
  %1103 = vmatprep.subr.mxu0 0.0
  %1104 = vmatpush2.msra.mxu0 0.0
  %1105 = vmatprep.subr.mxu0 0.0
  %1106 = vmatpush2.msra.mxu0 0.0
  %1107 = vmatprep.mubr.f32.mxu0 0.0
  %1108 = vmatmul.mubr.f32.gmra.mxu0 %v1041
  %v1109 = vpop.f32.mrf.mxu0
  %v1110 = vadd.f32 0.0, %v1109
  %v1111 = vpop.f32.mrf.mxu0
  %v1112 = vadd.f32 0.0, %v1111
  %1113 = vdwg.mxu0
  %v1114 = vadd.f32 %v1038, %v1110
  %v1115 = vadd.f32 %v1039, %v1112
  %v1116 = vxor.u32 %v1114, 2147483648
  %v1117 = vxor.u32 %v1115, 2147483648
  %v1118 = vmul.f32 %v1116, 1.442695
  %v1119 = vpow.pop %v1118
  %v1120 = vmul.f32 %v1117, 1.442695
  %v1121 = vpow.pop %v1120
  %v1122 = vadd.f32 %v1119, 1.0
  %v1123 = vadd.f32 %v1121, 1.0
  %v1124 = vrcp.pop %v1122
  %v1125 = vmul.f32 1.0, %v1124
  %v1126 = vrcp.pop %v1123
  %v1127 = vmul.f32 1.0, %v1126
  %v1128 = vtanh.pop %v1115
  %v1129 = vmul.f32 %v1125, %v1030
  %1131 = vrot.lane.b32.xlu0 %v1128, 64
  %v1132 = vpop.permute.xlu0 %1131
  %v1134 = vmul.f32 %v1125, %v1132
  %1136 = vrot.lane.b32.xlu0 %v1134, 64
  %v1137 = vpop.permute.xlu0 %1136
  %v1139 = vadd.f32 %v1129, %v1137
  %v1140 = vtanh.pop %v1139
  %1142 = vrot.lane.b32.xlu0 %v1140, 64
  %v1143 = vpop.permute.xlu0 %1142
  %v1145 = vmul.f32 %v1127, %v1143
  %v1146 = vadd.f32 %v1037, %v1145
  %v1147 = vld [vmem:[#allocation2 + $0x70] sm:$0xff]
  %v1148 = vld [vmem:[#allocation2 + $0x78] sm:$0xff]
  %v1150 = vsel %vm385, %v1145, 0
  %1152 = vmatprep.subr.mxu0 0.0
  %1153 = vmatpush1.msra.mxu0 0.0
  %1154 = vmatprep.subr.mxu0 0.0
  %1155 = vmatpush1.msra.mxu0 0.0
  %1156 = vmatprep.subr.mxu0 0.0
  %1157 = vmatpush1.msra.mxu0 0.0
  %1158 = vmatprep.subr.mxu0 0.0
  %1159 = vmatpush1.msra.mxu0 0.0
  %1160 = vmatprep.subr.mxu0 0.0
  %1161 = vmatpush1.msra.mxu0 0.0
  %1162 = vmatprep.subr.mxu0 0.0
  %1163 = vmatpush1.msra.mxu0 0.0
  %1164 = vmatprep.subr.mxu0 0.0
  %1165 = vmatpush1.msra.mxu0 0.0
  %1166 = vmatprep.subr.mxu0 0.0
  %1167 = vmatpush1.msra.mxu0 0.0
  %1168 = vmatprep.subr.mxu0 %v382
  %1169 = vmatpush1.msra.mxu0 %v381
  %1170 = vmatprep.subr.mxu0 %v380
  %1171 = vmatpush1.msra.mxu0 %v379
  %1172 = vmatprep.subr.mxu0 %v378
  %1173 = vmatpush1.msra.mxu0 %v377
  %1174 = vmatprep.subr.mxu0 %v376
  %1175 = vmatpush1.msra.mxu0 %v375
  %1176 = vmatprep.subr.mxu0 %v374
  %1177 = vmatpush1.msra.mxu0 %v373
  %1178 = vmatprep.subr.mxu0 %v372
  %1179 = vmatpush1.msra.mxu0 %v371
  %1180 = vmatprep.subr.mxu0 %v370
  %1181 = vmatpush1.msra.mxu0 %v369
  %1182 = vmatprep.subr.mxu0 %v368
  %1183 = vmatpush1.msra.mxu0 %v367
  %1184 = vmatprep.subr.mxu0 0.0
  %1185 = vmatpush2.msra.mxu0 0.0
  %1186 = vmatprep.subr.mxu0 0.0
  %1187 = vmatpush2.msra.mxu0 0.0
  %1188 = vmatprep.subr.mxu0 0.0
  %1189 = vmatpush2.msra.mxu0 0.0
  %1190 = vmatprep.subr.mxu0 0.0
  %1191 = vmatpush2.msra.mxu0 0.0
  %1192 = vmatprep.subr.mxu0 0.0
  %1193 = vmatpush2.msra.mxu0 0.0
  %1194 = vmatprep.subr.mxu0 0.0
  %1195 = vmatpush2.msra.mxu0 0.0
  %1196 = vmatprep.subr.mxu0 0.0
  %1197 = vmatpush2.msra.mxu0 0.0
  %1198 = vmatprep.subr.mxu0 0.0
  %1199 = vmatpush2.msra.mxu0 0.0
  %1200 = vmatprep.subr.mxu0 0.0
  %1201 = vmatpush2.msra.mxu0 0.0
  %1202 = vmatprep.subr.mxu0 0.0
  %1203 = vmatpush2.msra.mxu0 0.0
  %1204 = vmatprep.subr.mxu0 0.0
  %1205 = vmatpush2.msra.mxu0 0.0
  %1206 = vmatprep.subr.mxu0 0.0
  %1207 = vmatpush2.msra.mxu0 0.0
  %1208 = vmatprep.subr.mxu0 0.0
  %1209 = vmatpush2.msra.mxu0 0.0
  %1210 = vmatprep.subr.mxu0 0.0
  %1211 = vmatpush2.msra.mxu0 0.0
  %1212 = vmatprep.subr.mxu0 0.0
  %1213 = vmatpush2.msra.mxu0 0.0
  %1214 = vmatprep.subr.mxu0 0.0
  %1215 = vmatpush2.msra.mxu0 0.0
  %1216 = vmatprep.mubr.f32.mxu0 0.0
  %1217 = vmatmul.mubr.f32.gmra.mxu0 %v1150
  %v1218 = vpop.f32.mrf.mxu0
  %v1219 = vadd.f32 0.0, %v1218
  %v1220 = vpop.f32.mrf.mxu0
  %v1221 = vadd.f32 0.0, %v1220
  %1222 = vdwg.mxu0
  %v1223 = vadd.f32 %v1147, %v1219
  %v1224 = vadd.f32 %v1148, %v1221
  %v1225 = vxor.u32 %v1223, 2147483648
  %v1226 = vxor.u32 %v1224, 2147483648
  %v1227 = vmul.f32 %v1225, 1.442695
  %v1228 = vpow.pop %v1227
  %v1229 = vmul.f32 %v1226, 1.442695
  %v1230 = vpow.pop %v1229
  %v1231 = vadd.f32 %v1228, 1.0
  %v1232 = vadd.f32 %v1230, 1.0
  %v1233 = vrcp.pop %v1231
  %v1234 = vmul.f32 1.0, %v1233
  %v1235 = vrcp.pop %v1232
  %v1236 = vmul.f32 1.0, %v1235
  %v1237 = vtanh.pop %v1224
  %v1238 = vmul.f32 %v1234, %v1139
  %1240 = vrot.lane.b32.xlu0 %v1237, 64
  %v1241 = vpop.permute.xlu0 %1240
  %v1243 = vmul.f32 %v1234, %v1241
  %1245 = vrot.lane.b32.xlu0 %v1243, 64
  %v1246 = vpop.permute.xlu0 %1245
  %v1248 = vadd.f32 %v1238, %v1246
  %v1249 = vtanh.pop %v1248
  %1251 = vrot.lane.b32.xlu0 %v1249, 64
  %v1252 = vpop.permute.xlu0 %1251
  %v1254 = vmul.f32 %v1236, %v1252
  %v1255 = vadd.f32 %v1146, %v1254
  %1256 = vrot.lane.b32.xlu0 %v600, 64
  %v1257 = vpop.permute.xlu0 %1256
  %1259 = vrot.lane.b32.xlu0 %v1145, 64
  %v1260 = vpop.permute.xlu0 %1259
  %1262 = vrot.lane.b32.xlu0 %v818, 64
  %v1263 = vpop.permute.xlu0 %1262
  %1265 = vrot.lane.b32.xlu0 %v927, 64
  %v1266 = vpop.permute.xlu0 %1265
  %1268 = vrot.lane.b32.xlu0 %v1036, 64
  %v1269 = vpop.permute.xlu0 %1268
  %1271 = vrot.lane.b32.xlu0 %v709, 64
  %v1272 = vpop.permute.xlu0 %1271
  %1275 = vrot.lane.b32.xlu0 %v1254, 64
  %v1276 = vpop.permute.xlu0 %1275
  %1278 = vrot.lane.b32.xlu0 %v491, 64
  %v1279 = vpop.permute.xlu0 %1278
  %vm1281 = vcmask 261120
  %v1282 = vsel %vm1281, %v491, %v1254
  %v1283 = vsel %vm385, %v1282, %v1257
  %vm1284 = vcmask 785408
  %v1285 = vsel %vm1284, %v1283, %v1260
  %v1286 = vsel %vm1281, %v709, %v1036
  %v1287 = vsel %vm385, %v1286, %v1263
  %v1288 = vsel %vm1284, %v1287, %v1266
  %v1289 = vsel %vm1281, %v927, %v818
  %v1290 = vsel %vm385, %v1289, %v1269
  %v1291 = vsel %vm1284, %v1290, %v1272
  %v1292 = vsel %vm1281, %v1145, %v600
  %v1293 = vsel %vm385, %v1292, %v1276
  %v1294 = vsel %vm1284, %v1293, %v1279
  %1295 = vst [vmem:[%s4] sm:$0xff] %v1285
  %1296 = vst [vmem:[%s4 + $0x8] sm:$0xff] %v1288
  %1297 = vst [vmem:[%s4 + $0x10] sm:$0xff] %v1291
  %1298 = vst [vmem:[%s4 + $0x18] sm:$0xff] %v1294
  %v1299 = vmul.f32 %v1255, 0.125
  %1300 = vst.msk [vmem:[%s5] sm:$0xff] %vm385, %v1299
  // Predicated region
  $region18: #{bilstm_forward.1} parent=0 // pred_check
    _
  $region19: #{bilstm_forward.1} parent=0 // pred_check_branch
    %1302 = sbr.rel (0) target = $region21
  $region20: #{bilstm_forward.1} parent=0 // pred_region
    _
  $region21: #{bilstm_forward.1} parent=0 // pred_fallthru
    _
  // Predicated region
  $region22: #{bilstm_forward.1} parent=0 // pred_check
    _
  $region23: #{bilstm_forward.1} parent=0 // pred_check_branch
    %1304 = sbr.rel (0) target = $region25
  $region24: #{bilstm_forward.1} parent=0 // pred_region
    _
  $region25: #{bilstm_forward.1} parent=0 // pred_fallthru
    _
  // Predicated region
  $region26: #{bilstm_forward.1} parent=0 // pred_check
    _
  $region27: #{bilstm_forward.1} parent=0 // pred_check_branch
    %1306 = sbr.rel (0) target = $region29
  $region28: #{bilstm_forward.1} parent=0 // pred_region
    _
  $region29: #{bilstm_forward.1} parent=0 // pred_fallthru
    _
  // Predicated region
  $region30: #{bilstm_forward.1} parent=0 // pred_check
    _
  $region31: #{bilstm_forward.1} parent=0 // pred_check_branch
    %1308 = sbr.rel (0) target = $region33
  $region32: #{bilstm_forward.1} parent=0 // pred_region
    _
  $region33: #{bilstm_forward.1} parent=0 // pred_fallthru
    _

</llo_original>
